<compile_context>
chip_gen: v6e
topology: v6e:2x2x1
jax: 0.10.0
libtpu: 0.0.40
codegen_flags: <defaults>
</compile_context>

<pallas_src>
import functools

import jax
import jax.numpy as jnp
from jax.experimental import pallas as pl
from jax.experimental.pallas import tpu as pltpu


# ----------------------------------------------------------------------------
# Kernels
# ----------------------------------------------------------------------------

def _stack_up2_kernel(x_ref, wc_ref, bc_ref, wd_ref, bd_ref, wrs_ref, brs_ref,
                      w2_ref, b2_ref, o_ref, pad_ref, *, dilations, T, C):
    # x:   (1, T, 1)          causal conv input
    # wc:  (1, C)  bc: (1, C) causal Conv1d(1, C, k=1)
    # wd:  (n, 3C, C)         dilated conv weights, taps stacked along Cin
    # bd:  (n, 1, C)
    # wrs: (n, C, 2C)         [res | skip] 1x1 conv weights
    # brs: (n, 1, 2C)
    # w2:  (C, 2C) b2:(1,2C)  upsample_x2 (ConvTranspose k=2 s=2), taps on Cout
    # o:   (1, T, 2C)         lane-dense output (wrapper reshapes to (2T, C))
    # pad: (T + 2*maxd, C)    VMEM scratch, zero halo for the dilated convs
    maxd = max(dilations)
    pad_ref[...] = jnp.zeros_like(pad_ref)

    # causal_conv: Conv1d(1 -> C, k=1) is a rank-1 broadcast multiply.
    res = x_ref[0] * wc_ref[...] + bc_ref[...]                  # (T, C)
    skip = jnp.zeros((T, C), dtype=jnp.float32)

    for i, d in enumerate(dilations):
        # Place the current residual in the centre of the zero-padded scratch;
        # halo rows are never written, so they stay zero.
        pad_ref[maxd:maxd + T, :] = res
        xpad = pad_ref[...]
        taps = [xpad[maxd + (k - 1) * d: maxd + (k - 1) * d + T, :]
                for k in range(3)]
        # One K=3C matmul for the dilated conv (instead of 3 K=C matmuls).
        z = jnp.dot(jnp.concatenate(taps, axis=1), wd_ref[i],
                    preferred_element_type=jnp.float32) + bd_ref[i]
        g = jnp.tanh(z) * jax.nn.sigmoid(z)
        # One N=2C matmul for the fused residual|skip 1x1 convs.
        rs = jnp.dot(g, wrs_ref[i],
                     preferred_element_type=jnp.float32) + brs_ref[i]
        res = res + rs[:, :C]
        skip = skip + rs[:, C:]

    out = jnp.maximum(skip, 0.0)                                # relu(sum(skips))
    # upsample_x2 + relu, written lane-dense as (T, 2C).
    up = jnp.dot(out, w2_ref[...],
                 preferred_element_type=jnp.float32) + b2_ref[...]
    o_ref[0] = jnp.maximum(up, 0.0)


def _mid_up3_out_kernel(h_ref, wm_ref, bm_ref, w3_ref, b3_ref, wo_ref, bo_ref,
                        o_ref, pad_ref, *, T2, C, MU, n_mid, pad):
    # h:  (1, T2, C)          input (already reshaped to 2x length)
    # wm: (3C, C)  bm: (1, C) mid_conv (k=3, pad=1), taps stacked along Cin
    # w3: (C, 3)   b3: (1, 1) upsample_x3 (ConvTranspose 128->1, k=3, s=3)
    # wo: (1, MU)  bo: (1,MU) out_conv (Conv1d 1->MU, k=1)
    # o:  (1, T2, 3*MU)       lane-dense output (wrapper reshapes to (3*T2, MU))
    # pad:(T2 + 2*pad, C)     VMEM scratch with zero halo
    pad_ref[...] = jnp.zeros_like(pad_ref)
    h = h_ref[0]                                                # (T2, C)
    wm = wm_ref[...]
    bm = bm_ref[...]
    for _ in range(n_mid):
        pad_ref[pad:pad + T2, :] = h
        xpad = pad_ref[...]
        taps = [xpad[pad - 1 + k: pad - 1 + k + T2, :] for k in range(3)]
        z = jnp.dot(jnp.concatenate(taps, axis=1), wm,
                    preferred_element_type=jnp.float32) + bm
        h = jnp.maximum(z, 0.0)

    # upsample_x3 (128 -> 1) + relu
    u = jnp.dot(h, w3_ref[...],
                preferred_element_type=jnp.float32) + b3_ref[...]
    u = jnp.maximum(u, 0.0)                                     # (T2, 3)

    # out_conv (1 -> MU, k=1), emitted lane-dense as (T2, 3*MU).
    wo = wo_ref[...]
    bo = bo_ref[...]
    cols = [u[:, j:j + 1] * wo + bo for j in range(3)]
    o_ref[0] = jnp.concatenate(cols, axis=1)


# ----------------------------------------------------------------------------
# Wrappers (pallas_call glue)
# ----------------------------------------------------------------------------

def wavenet_stack_up2(x, wc, bc, wd_all, bd_all, wrs_all, brs_all,
                      w2cat, b2cat, dilations):
    # x: (B, T, 1) -> (B, T, 2C) lane-dense (caller reshapes to (B, 2T, C)).
    B, T, _ = x.shape
    C = wc.shape[1]
    maxd = max(dilations)
    kernel = functools.partial(_stack_up2_kernel,
                               dilations=tuple(dilations), T=T, C=C)
    return pl.pallas_call(
        kernel,
        out_shape=jax.ShapeDtypeStruct((B, T, 2 * C), jnp.float32),
        grid=(B,),
        in_specs=[
            pl.BlockSpec((1, T, 1), lambda b: (b, 0, 0)),
            pl.BlockSpec((1, C), lambda b: (0, 0)),
            pl.BlockSpec((1, C), lambda b: (0, 0)),
            pl.BlockSpec(wd_all.shape, lambda b: (0, 0, 0)),
            pl.BlockSpec(bd_all.shape, lambda b: (0, 0, 0)),
            pl.BlockSpec(wrs_all.shape, lambda b: (0, 0, 0)),
            pl.BlockSpec(brs_all.shape, lambda b: (0, 0, 0)),
            pl.BlockSpec((C, 2 * C), lambda b: (0, 0)),
            pl.BlockSpec((1, 2 * C), lambda b: (0, 0)),
        ],
        out_specs=pl.BlockSpec((1, T, 2 * C), lambda b: (b, 0, 0)),
        scratch_shapes=[pltpu.VMEM((T + 2 * maxd, C), jnp.float32)],
        compiler_params=pltpu.CompilerParams(
            dimension_semantics=("parallel",)),
    )(x, wc, bc, wd_all, bd_all, wrs_all, brs_all, w2cat, b2cat)


def mid_up3_out(h, wm_cat, bm, w3, b3, wo, bo, n_mid=5):
    # h: (B, T2, C) -> (B, T2, 3*MU) lane-dense (caller reshapes to (B, 3*T2, MU)).
    B, T2, C = h.shape
    MU = wo.shape[1]
    PAD = 8   # >= 1; kept 8-row aligned for cheap sublane stores
    kernel = functools.partial(_mid_up3_out_kernel, T2=T2, C=C, MU=MU,
                               n_mid=n_mid, pad=PAD)
    return pl.pallas_call(
        kernel,
        out_shape=jax.ShapeDtypeStruct((B, T2, 3 * MU), jnp.float32),
        grid=(B,),
        in_specs=[
            pl.BlockSpec((1, T2, C), lambda b: (b, 0, 0)),
            pl.BlockSpec((3 * C, C), lambda b: (0, 0)),
            pl.BlockSpec((1, C), lambda b: (0, 0)),
            pl.BlockSpec((C, 3), lambda b: (0, 0)),
            pl.BlockSpec((1, 1), lambda b: (0, 0)),
            pl.BlockSpec((1, MU), lambda b: (0, 0)),
            pl.BlockSpec((1, MU), lambda b: (0, 0)),
        ],
        out_specs=pl.BlockSpec((1, T2, 3 * MU), lambda b: (b, 0, 0)),
        scratch_shapes=[pltpu.VMEM((T2 + 2 * PAD, C), jnp.float32)],
        compiler_params=pltpu.CompilerParams(
            dimension_semantics=("parallel",)),
    )(h, wm_cat, bm, w3, b3, wo, bo)


# ----------------------------------------------------------------------------
# Parameters (deterministic synthetic init, PyTorch weight shapes)
# ----------------------------------------------------------------------------

def init_params(key, mu=256, n_blocks=5, res_ch=128, skip_ch=128):
    n_keys = 10 + 6 * n_blocks
    keys = iter(jax.random.split(key, n_keys))

    def w(shape, scale=0.05):
        return scale * jax.random.normal(next(keys), shape, dtype=jnp.float32)

    params = {
        "causal_w": w((res_ch, 1, 1)), "causal_b": w((res_ch,)),
        "up2_w": w((res_ch, res_ch, 2)), "up2_b": w((res_ch,)),
        "up3_w": w((res_ch, 1, 3)), "up3_b": w((1,)),
        "mid_w": w((res_ch, res_ch, 3)), "mid_b": w((res_ch,)),
        "out_w": w((mu, 1, 1)), "out_b": w((mu,)),
        "blocks": [],
    }
    for _ in range(n_blocks):
        params["blocks"].append({
            "dil_w": w((res_ch, res_ch, 3)), "dil_b": w((res_ch,)),
            "res_w": w((res_ch, res_ch, 1)), "res_b": w((res_ch,)),
            "skip_w": w((skip_ch, res_ch, 1)), "skip_b": w((skip_ch,)),
        })
    # `down_conv` from __init__ is unused in forward(); intentionally omitted.
    return params


# ----------------------------------------------------------------------------
# Forward pass
# ----------------------------------------------------------------------------

def upsampler_forward(params, x_ncw, n_blocks=5):
    # x_ncw: (B, 1, L) in PyTorch NCW layout.  Returns (B, mu, 6*L).
    dilations = [2 ** i for i in range(n_blocks)]
    B, _, L = x_ncw.shape
    C = params["causal_b"].shape[0]
    MU = params["out_b"].shape[0]

    x = jnp.transpose(x_ncw, (0, 2, 1)).astype(jnp.float32)        # (B, L, 1)

    # ---- weight prep (tiny, done once per forward on the host/XLA side) ----
    wc = params["causal_w"][:, 0, 0][None, :]                      # (1, C)
    bc = params["causal_b"].reshape(1, C)

    wd_list, bd_list, wrs_list, brs_list = [], [], [], []
    for bp in params["blocks"]:
        # (Cout, Cin, 3) -> (3, Cin, Cout) -> (3*Cin, Cout): taps stacked on Cin.
        wd_list.append(jnp.transpose(bp["dil_w"], (2, 1, 0)).reshape(3 * C, C))
        bd_list.append(bp["dil_b"].reshape(1, C))
        # [res | skip] 1x1 convs fused along Cout.
        wrs_list.append(jnp.concatenate([bp["res_w"][:, :, 0].T,
                                         bp["skip_w"][:, :, 0].T], axis=1))
        brs_list.append(jnp.concatenate([bp["res_b"],
                                         bp["skip_b"]]).reshape(1, 2 * C))
    wd_all = jnp.stack(wd_list)                                    # (n, 3C, C)
    bd_all = jnp.stack(bd_list)                                    # (n, 1, C)
    wrs_all = jnp.stack(wrs_list)                                  # (n, C, 2C)
    brs_all = jnp.stack(brs_list)                                  # (n, 1, 2C)

    # ConvTranspose1d(C, C, k=2, s=2): weight (Cin, Cout, 2), taps fused on Cout.
    w2cat = jnp.concatenate([params["up2_w"][:, :, 0],
                             params["up2_w"][:, :, 1]], axis=1)    # (C, 2C)
    b2cat = jnp.concatenate([params["up2_b"],
                             params["up2_b"]]).reshape(1, 2 * C)

    wm_cat = jnp.transpose(params["mid_w"], (2, 1, 0)).reshape(3 * C, C)
    bm = params["mid_b"].reshape(1, C)

    w3 = params["up3_w"][:, 0, :]                                  # (C, 3)
    b3 = params["up3_b"].reshape(1, 1)
    wo = params["out_w"][:, 0, 0][None, :]                         # (1, MU)
    bo = params["out_b"].reshape(1, MU)

    # ---- kernel 1: causal conv + dilation stack + skip relu + upsample_x2 ----
    h = wavenet_stack_up2(x, wc, bc, wd_all, bd_all, wrs_all, brs_all,
                          w2cat, b2cat, dilations)                 # (B, L, 2C)
    h = h.reshape(B, 2 * L, C)                                     # free view

    # ---- kernel 2: 5x mid_conv+relu + upsample_x3+relu + out_conv ----
    out = mid_up3_out(h, wm_cat, bm, w3, b3, wo, bo, n_mid=5)      # (B, 2L, 3*MU)
    out = out.reshape(B, 6 * L, MU)                                # free view
    return jnp.transpose(out, (0, 2, 1))                           # (B, MU, 6L)


# ----------------------------------------------------------------------------
# Main
# ----------------------------------------------------------------------------

if __name__ == "__main__":
    key = jax.random.PRNGKey(0)
    k_param, k_x = jax.random.split(key)

    B, L, MU = 2, 16, 256
    params = init_params(k_param, mu=MU, n_blocks=5)
    x = jax.random.normal(k_x, (B, 1, L), dtype=jnp.float32)       # NCW like PyTorch

    out = upsampler_forward(params, x, n_blocks=5)
    out = jax.block_until_ready(out)

    assert out.shape == (B, MU, 6 * L), out.shape
    assert bool(jnp.all(jnp.isfinite(out)))
    print("KERNEL_OK")
</pallas_src>

<mosaic_0001>
module attributes {stable_mosaic.version = 11 : i64} {
  func.func @_stack_up2_kernel(%arg0: i32, %arg1: memref<1x16x1xf32, #tpu.memory_space<vmem>>, %arg2: memref<1x128xf32, #tpu.memory_space<vmem>>, %arg3: memref<1x128xf32, #tpu.memory_space<vmem>>, %arg4: memref<5x384x128xf32, #tpu.memory_space<vmem>>, %arg5: memref<5x1x128xf32, #tpu.memory_space<vmem>>, %arg6: memref<5x128x256xf32, #tpu.memory_space<vmem>>, %arg7: memref<5x1x256xf32, #tpu.memory_space<vmem>>, %arg8: memref<128x256xf32, #tpu.memory_space<vmem>>, %arg9: memref<1x256xf32, #tpu.memory_space<vmem>>, %arg10: memref<1x16x256xf32, #tpu.memory_space<vmem>>, %arg11: memref<48x128xf32, #tpu.memory_space<vmem>>) attributes {dimension_semantics = [#tpu.dimension_semantics<parallel>], iteration_bounds = array<i64: 2>, scalar_prefetch = 0 : i64, scratch_operands = 1 : i64, tpu.core_type = #tpu.core_type<tc>, window_params = [{transform_indices = @transform_0, window_bounds = array<i64: 1, 16, 1>}, {pipeline_mode = #tpu.pipeline_mode<synchronous>, transform_indices = @transform_1, window_bounds = array<i64: 1, 128>}, {pipeline_mode = #tpu.pipeline_mode<synchronous>, transform_indices = @transform_2, window_bounds = array<i64: 1, 128>}, {pipeline_mode = #tpu.pipeline_mode<synchronous>, transform_indices = @transform_3, window_bounds = array<i64: 5, 384, 128>}, {pipeline_mode = #tpu.pipeline_mode<synchronous>, transform_indices = @transform_4, window_bounds = array<i64: 5, 1, 128>}, {pipeline_mode = #tpu.pipeline_mode<synchronous>, transform_indices = @transform_5, window_bounds = array<i64: 5, 128, 256>}, {pipeline_mode = #tpu.pipeline_mode<synchronous>, transform_indices = @transform_6, window_bounds = array<i64: 5, 1, 256>}, {pipeline_mode = #tpu.pipeline_mode<synchronous>, transform_indices = @transform_7, window_bounds = array<i64: 128, 256>}, {pipeline_mode = #tpu.pipeline_mode<synchronous>, transform_indices = @transform_8, window_bounds = array<i64: 1, 256>}, {transform_indices = @transform_9, window_bounds = array<i64: 1, 16, 256>}]} {
    %cst = arith.constant 0.000000e+00 : f32
    %0 = vector.broadcast %cst : f32 to vector<48x128xf32>
    %c0 = arith.constant 0 : index
    %c0_0 = arith.constant 0 : index
    %1 = vector.load %arg11[%c0, %c0_0] : memref<48x128xf32, #tpu.memory_space<vmem>>, vector<48x128xf32>
    tpu.vector_store %arg11[%c0, %c0_0], %0 {strides = array<i32>} : memref<48x128xf32, #tpu.memory_space<vmem>>, vector<48x128xf32>,
    %c0_1 = arith.constant 0 : index
    %c0_2 = arith.constant 0 : index
    %c0_3 = arith.constant 0 : index
    %2 = vector.load %arg1[%c0_1, %c0_2, %c0_3] : memref<1x16x1xf32, #tpu.memory_space<vmem>>, vector<1x16x1xf32>
    %3 = vector.shape_cast %2 : vector<1x16x1xf32> to vector<16x1xf32>
    %c0_4 = arith.constant 0 : index
    %c0_5 = arith.constant 0 : index
    %4 = vector.load %arg2[%c0_4, %c0_5] : memref<1x128xf32, #tpu.memory_space<vmem>>, vector<1x128xf32>
    %5 = vector.broadcast %3 : vector<16x1xf32> to vector<16x128xf32>
    %6 = vector.broadcast %4 : vector<1x128xf32> to vector<16x128xf32>
    %7 = arith.mulf %5, %6 : vector<16x128xf32>
    %c0_6 = arith.constant 0 : index
    %c0_7 = arith.constant 0 : index
    %8 = vector.load %arg3[%c0_6, %c0_7] : memref<1x128xf32, #tpu.memory_space<vmem>>, vector<1x128xf32>
    %9 = vector.broadcast %8 : vector<1x128xf32> to vector<16x128xf32>
    %10 = arith.addf %7, %9 : vector<16x128xf32>
    %cst_8 = arith.constant 0.000000e+00 : f32
    %11 = vector.broadcast %cst_8 : f32 to vector<16x128xf32>
    %c16 = arith.constant 16 : index
    %c0_9 = arith.constant 0 : index
    %12 = vector.load %arg11[%c16, %c0_9] : memref<48x128xf32, #tpu.memory_space<vmem>>, vector<16x128xf32>
    tpu.vector_store %arg11[%c16, %c0_9], %10 {strides = array<i32>} : memref<48x128xf32, #tpu.memory_space<vmem>>, vector<16x128xf32>,
    %c0_10 = arith.constant 0 : index
    %c0_11 = arith.constant 0 : index
    %13 = vector.load %arg11[%c0_10, %c0_11] : memref<48x128xf32, #tpu.memory_space<vmem>>, vector<48x128xf32>
    %14 = vector.extract_strided_slice %13 {offsets = [15, 0], sizes = [16, 128], strides = [1, 1]} : vector<48x128xf32> to vector<16x128xf32>
    %15 = vector.extract_strided_slice %13 {offsets = [16, 0], sizes = [16, 128], strides = [1, 1]} : vector<48x128xf32> to vector<16x128xf32>
    %16 = vector.extract_strided_slice %13 {offsets = [17, 0], sizes = [16, 128], strides = [1, 1]} : vector<48x128xf32> to vector<16x128xf32>
    %17 = tpu.concatenate %14, %15, %16 in 1 : vector<16x128xf32>, vector<16x128xf32>, vector<16x128xf32> -> vector<16x384xf32>
    %c0_12 = arith.constant 0 : index
    %c0_13 = arith.constant 0 : index
    %c0_14 = arith.constant 0 : index
    %18 = vector.load %arg4[%c0_12, %c0_13, %c0_14] : memref<5x384x128xf32, #tpu.memory_space<vmem>>, vector<1x384x128xf32>
    %19 = vector.shape_cast %18 : vector<1x384x128xf32> to vector<384x128xf32>
    %cst_15 = arith.constant dense<0.000000e+00> : vector<16x128xf32>
    %20 = tpu.matmul %17, %19, %cst_15 {dimension_numbers = #tpu.dot_dimension_numbers<[1], [0], [0], [1], [0, 0, 1, 1], [], []>} : vector<16x384xf32>, vector<384x128xf32>, vector<16x128xf32> -> vector<16x128xf32>
    %c0_16 = arith.constant 0 : index
    %c0_17 = arith.constant 0 : index
    %c0_18 = arith.constant 0 : index
    %21 = vector.load %arg5[%c0_16, %c0_17, %c0_18] : memref<5x1x128xf32, #tpu.memory_space<vmem>>, vector<1x1x128xf32>
    %22 = vector.shape_cast %21 : vector<1x1x128xf32> to vector<1x128xf32>
    %23 = vector.broadcast %22 : vector<1x128xf32> to vector<16x128xf32>
    %24 = arith.addf %20, %23 : vector<16x128xf32>
    %25 = math.tanh %24 : vector<16x128xf32>
    %26 = arith.negf %24 : vector<16x128xf32>
    %27 = math.exp %26 : vector<16x128xf32>
    %cst_19 = arith.constant 1.000000e+00 : f32
    %28 = vector.broadcast %cst_19 : f32 to vector<16x128xf32>
    %29 = arith.addf %28, %27 : vector<16x128xf32>
    %30 = arith.divf %28, %29 : vector<16x128xf32>
    %31 = arith.mulf %25, %30 : vector<16x128xf32>
    %c0_20 = arith.constant 0 : index
    %c0_21 = arith.constant 0 : index
    %c0_22 = arith.constant 0 : index
    %32 = vector.load %arg6[%c0_20, %c0_21, %c0_22] : memref<5x128x256xf32, #tpu.memory_space<vmem>>, vector<1x128x256xf32>
    %33 = vector.shape_cast %32 : vector<1x128x256xf32> to vector<128x256xf32>
    %cst_23 = arith.constant dense<0.000000e+00> : vector<16x256xf32>
    %34 = tpu.matmul %31, %33, %cst_23 {dimension_numbers = #tpu.dot_dimension_numbers<[1], [0], [0], [1], [0, 0, 1, 1], [], []>} : vector<16x128xf32>, vector<128x256xf32>, vector<16x256xf32> -> vector<16x256xf32>
    %c0_24 = arith.constant 0 : index
    %c0_25 = arith.constant 0 : index
    %c0_26 = arith.constant 0 : index
    %35 = vector.load %arg7[%c0_24, %c0_25, %c0_26] : memref<5x1x256xf32, #tpu.memory_space<vmem>>, vector<1x1x256xf32>
    %36 = vector.shape_cast %35 : vector<1x1x256xf32> to vector<1x256xf32>
    %37 = vector.broadcast %36 : vector<1x256xf32> to vector<16x256xf32>
    %38 = arith.addf %34, %37 : vector<16x256xf32>
    %39 = vector.extract_strided_slice %38 {offsets = [0, 0], sizes = [16, 128], strides = [1, 1]} : vector<16x256xf32> to vector<16x128xf32>
    %40 = arith.addf %10, %39 : vector<16x128xf32>
    %41 = vector.extract_strided_slice %38 {offsets = [0, 128], sizes = [16, 128], strides = [1, 1]} : vector<16x256xf32> to vector<16x128xf32>
    %42 = arith.addf %11, %41 : vector<16x128xf32>
    %c16_27 = arith.constant 16 : index
    %c0_28 = arith.constant 0 : index
    %43 = vector.load %arg11[%c16_27, %c0_28] : memref<48x128xf32, #tpu.memory_space<vmem>>, vector<16x128xf32>
    tpu.vector_store %arg11[%c16_27, %c0_28], %40 {strides = array<i32>} : memref<48x128xf32, #tpu.memory_space<vmem>>, vector<16x128xf32>,
    %c0_29 = arith.constant 0 : index
    %c0_30 = arith.constant 0 : index
    %44 = vector.load %arg11[%c0_29, %c0_30] : memref<48x128xf32, #tpu.memory_space<vmem>>, vector<48x128xf32>
    %45 = vector.extract_strided_slice %44 {offsets = [14, 0], sizes = [16, 128], strides = [1, 1]} : vector<48x128xf32> to vector<16x128xf32>
    %46 = vector.extract_strided_slice %44 {offsets = [16, 0], sizes = [16, 128], strides = [1, 1]} : vector<48x128xf32> to vector<16x128xf32>
    %47 = vector.extract_strided_slice %44 {offsets = [18, 0], sizes = [16, 128], strides = [1, 1]} : vector<48x128xf32> to vector<16x128xf32>
    %48 = tpu.concatenate %45, %46, %47 in 1 : vector<16x128xf32>, vector<16x128xf32>, vector<16x128xf32> -> vector<16x384xf32>
    %c1 = arith.constant 1 : index
    %c0_31 = arith.constant 0 : index
    %c0_32 = arith.constant 0 : index
    %49 = vector.load %arg4[%c1, %c0_31, %c0_32] : memref<5x384x128xf32, #tpu.memory_space<vmem>>, vector<1x384x128xf32>
    %50 = vector.shape_cast %49 : vector<1x384x128xf32> to vector<384x128xf32>
    %cst_33 = arith.constant dense<0.000000e+00> : vector<16x128xf32>
    %51 = tpu.matmul %48, %50, %cst_33 {dimension_numbers = #tpu.dot_dimension_numbers<[1], [0], [0], [1], [0, 0, 1, 1], [], []>} : vector<16x384xf32>, vector<384x128xf32>, vector<16x128xf32> -> vector<16x128xf32>
    %c1_34 = arith.constant 1 : index
    %c0_35 = arith.constant 0 : index
    %c0_36 = arith.constant 0 : index
    %52 = vector.load %arg5[%c1_34, %c0_35, %c0_36] : memref<5x1x128xf32, #tpu.memory_space<vmem>>, vector<1x1x128xf32>
    %53 = vector.shape_cast %52 : vector<1x1x128xf32> to vector<1x128xf32>
    %54 = vector.broadcast %53 : vector<1x128xf32> to vector<16x128xf32>
    %55 = arith.addf %51, %54 : vector<16x128xf32>
    %56 = math.tanh %55 : vector<16x128xf32>
    %57 = arith.negf %55 : vector<16x128xf32>
    %58 = math.exp %57 : vector<16x128xf32>
    %cst_37 = arith.constant 1.000000e+00 : f32
    %59 = vector.broadcast %cst_37 : f32 to vector<16x128xf32>
    %60 = arith.addf %59, %58 : vector<16x128xf32>
    %61 = arith.divf %59, %60 : vector<16x128xf32>
    %62 = arith.mulf %56, %61 : vector<16x128xf32>
    %c1_38 = arith.constant 1 : index
    %c0_39 = arith.constant 0 : index
    %c0_40 = arith.constant 0 : index
    %63 = vector.load %arg6[%c1_38, %c0_39, %c0_40] : memref<5x128x256xf32, #tpu.memory_space<vmem>>, vector<1x128x256xf32>
    %64 = vector.shape_cast %63 : vector<1x128x256xf32> to vector<128x256xf32>
    %cst_41 = arith.constant dense<0.000000e+00> : vector<16x256xf32>
    %65 = tpu.matmul %62, %64, %cst_41 {dimension_numbers = #tpu.dot_dimension_numbers<[1], [0], [0], [1], [0, 0, 1, 1], [], []>} : vector<16x128xf32>, vector<128x256xf32>, vector<16x256xf32> -> vector<16x256xf32>
    %c1_42 = arith.constant 1 : index
    %c0_43 = arith.constant 0 : index
    %c0_44 = arith.constant 0 : index
    %66 = vector.load %arg7[%c1_42, %c0_43, %c0_44] : memref<5x1x256xf32, #tpu.memory_space<vmem>>, vector<1x1x256xf32>
    %67 = vector.shape_cast %66 : vector<1x1x256xf32> to vector<1x256xf32>
    %68 = vector.broadcast %67 : vector<1x256xf32> to vector<16x256xf32>
    %69 = arith.addf %65, %68 : vector<16x256xf32>
    %70 = vector.extract_strided_slice %69 {offsets = [0, 0], sizes = [16, 128], strides = [1, 1]} : vector<16x256xf32> to vector<16x128xf32>
    %71 = arith.addf %40, %70 : vector<16x128xf32>
    %72 = vector.extract_strided_slice %69 {offsets = [0, 128], sizes = [16, 128], strides = [1, 1]} : vector<16x256xf32> to vector<16x128xf32>
    %73 = arith.addf %42, %72 : vector<16x128xf32>
    %c16_45 = arith.constant 16 : index
    %c0_46 = arith.constant 0 : index
    %74 = vector.load %arg11[%c16_45, %c0_46] : memref<48x128xf32, #tpu.memory_space<vmem>>, vector<16x128xf32>
    tpu.vector_store %arg11[%c16_45, %c0_46], %71 {strides = array<i32>} : memref<48x128xf32, #tpu.memory_space<vmem>>, vector<16x128xf32>,
    %c0_47 = arith.constant 0 : index
    %c0_48 = arith.constant 0 : index
    %75 = vector.load %arg11[%c0_47, %c0_48] : memref<48x128xf32, #tpu.memory_space<vmem>>, vector<48x128xf32>
    %76 = vector.extract_strided_slice %75 {offsets = [12, 0], sizes = [16, 128], strides = [1, 1]} : vector<48x128xf32> to vector<16x128xf32>
    %77 = vector.extract_strided_slice %75 {offsets = [16, 0], sizes = [16, 128], strides = [1, 1]} : vector<48x128xf32> to vector<16x128xf32>
    %78 = vector.extract_strided_slice %75 {offsets = [20, 0], sizes = [16, 128], strides = [1, 1]} : vector<48x128xf32> to vector<16x128xf32>
    %79 = tpu.concatenate %76, %77, %78 in 1 : vector<16x128xf32>, vector<16x128xf32>, vector<16x128xf32> -> vector<16x384xf32>
    %c2 = arith.constant 2 : index
    %c0_49 = arith.constant 0 : index
    %c0_50 = arith.constant 0 : index
    %80 = vector.load %arg4[%c2, %c0_49, %c0_50] : memref<5x384x128xf32, #tpu.memory_space<vmem>>, vector<1x384x128xf32>
    %81 = vector.shape_cast %80 : vector<1x384x128xf32> to vector<384x128xf32>
    %cst_51 = arith.constant dense<0.000000e+00> : vector<16x128xf32>
    %82 = tpu.matmul %79, %81, %cst_51 {dimension_numbers = #tpu.dot_dimension_numbers<[1], [0], [0], [1], [0, 0, 1, 1], [], []>} : vector<16x384xf32>, vector<384x128xf32>, vector<16x128xf32> -> vector<16x128xf32>
    %c2_52 = arith.constant 2 : index
    %c0_53 = arith.constant 0 : index
    %c0_54 = arith.constant 0 : index
    %83 = vector.load %arg5[%c2_52, %c0_53, %c0_54] : memref<5x1x128xf32, #tpu.memory_space<vmem>>, vector<1x1x128xf32>
    %84 = vector.shape_cast %83 : vector<1x1x128xf32> to vector<1x128xf32>
    %85 = vector.broadcast %84 : vector<1x128xf32> to vector<16x128xf32>
    %86 = arith.addf %82, %85 : vector<16x128xf32>
    %87 = math.tanh %86 : vector<16x128xf32>
    %88 = arith.negf %86 : vector<16x128xf32>
    %89 = math.exp %88 : vector<16x128xf32>
    %cst_55 = arith.constant 1.000000e+00 : f32
    %90 = vector.broadcast %cst_55 : f32 to vector<16x128xf32>
    %91 = arith.addf %90, %89 : vector<16x128xf32>
    %92 = arith.divf %90, %91 : vector<16x128xf32>
    %93 = arith.mulf %87, %92 : vector<16x128xf32>
    %c2_56 = arith.constant 2 : index
    %c0_57 = arith.constant 0 : index
    %c0_58 = arith.constant 0 : index
    %94 = vector.load %arg6[%c2_56, %c0_57, %c0_58] : memref<5x128x256xf32, #tpu.memory_space<vmem>>, vector<1x128x256xf32>
    %95 = vector.shape_cast %94 : vector<1x128x256xf32> to vector<128x256xf32>
    %cst_59 = arith.constant dense<0.000000e+00> : vector<16x256xf32>
    %96 = tpu.matmul %93, %95, %cst_59 {dimension_numbers = #tpu.dot_dimension_numbers<[1], [0], [0], [1], [0, 0, 1, 1], [], []>} : vector<16x128xf32>, vector<128x256xf32>, vector<16x256xf32> -> vector<16x256xf32>
    %c2_60 = arith.constant 2 : index
    %c0_61 = arith.constant 0 : index
    %c0_62 = arith.constant 0 : index
    %97 = vector.load %arg7[%c2_60, %c0_61, %c0_62] : memref<5x1x256xf32, #tpu.memory_space<vmem>>, vector<1x1x256xf32>
    %98 = vector.shape_cast %97 : vector<1x1x256xf32> to vector<1x256xf32>
    %99 = vector.broadcast %98 : vector<1x256xf32> to vector<16x256xf32>
    %100 = arith.addf %96, %99 : vector<16x256xf32>
    %101 = vector.extract_strided_slice %100 {offsets = [0, 0], sizes = [16, 128], strides = [1, 1]} : vector<16x256xf32> to vector<16x128xf32>
    %102 = arith.addf %71, %101 : vector<16x128xf32>
    %103 = vector.extract_strided_slice %100 {offsets = [0, 128], sizes = [16, 128], strides = [1, 1]} : vector<16x256xf32> to vector<16x128xf32>
    %104 = arith.addf %73, %103 : vector<16x128xf32>
    %c16_63 = arith.constant 16 : index
    %c0_64 = arith.constant 0 : index
    %105 = vector.load %arg11[%c16_63, %c0_64] : memref<48x128xf32, #tpu.memory_space<vmem>>, vector<16x128xf32>
    tpu.vector_store %arg11[%c16_63, %c0_64], %102 {strides = array<i32>} : memref<48x128xf32, #tpu.memory_space<vmem>>, vector<16x128xf32>,
    %c0_65 = arith.constant 0 : index
    %c0_66 = arith.constant 0 : index
    %106 = vector.load %arg11[%c0_65, %c0_66] : memref<48x128xf32, #tpu.memory_space<vmem>>, vector<48x128xf32>
    %107 = vector.extract_strided_slice %106 {offsets = [8, 0], sizes = [16, 128], strides = [1, 1]} : vector<48x128xf32> to vector<16x128xf32>
    %108 = vector.extract_strided_slice %106 {offsets = [16, 0], sizes = [16, 128], strides = [1, 1]} : vector<48x128xf32> to vector<16x128xf32>
    %109 = vector.extract_strided_slice %106 {offsets = [24, 0], sizes = [16, 128], strides = [1, 1]} : vector<48x128xf32> to vector<16x128xf32>
    %110 = tpu.concatenate %107, %108, %109 in 1 : vector<16x128xf32>, vector<16x128xf32>, vector<16x128xf32> -> vector<16x384xf32>
    %c3 = arith.constant 3 : index
    %c0_67 = arith.constant 0 : index
    %c0_68 = arith.constant 0 : index
    %111 = vector.load %arg4[%c3, %c0_67, %c0_68] : memref<5x384x128xf32, #tpu.memory_space<vmem>>, vector<1x384x128xf32>
    %112 = vector.shape_cast %111 : vector<1x384x128xf32> to vector<384x128xf32>
    %cst_69 = arith.constant dense<0.000000e+00> : vector<16x128xf32>
    %113 = tpu.matmul %110, %112, %cst_69 {dimension_numbers = #tpu.dot_dimension_numbers<[1], [0], [0], [1], [0, 0, 1, 1], [], []>} : vector<16x384xf32>, vector<384x128xf32>, vector<16x128xf32> -> vector<16x128xf32>
    %c3_70 = arith.constant 3 : index
    %c0_71 = arith.constant 0 : index
    %c0_72 = arith.constant 0 : index
    %114 = vector.load %arg5[%c3_70, %c0_71, %c0_72] : memref<5x1x128xf32, #tpu.memory_space<vmem>>, vector<1x1x128xf32>
    %115 = vector.shape_cast %114 : vector<1x1x128xf32> to vector<1x128xf32>
    %116 = vector.broadcast %115 : vector<1x128xf32> to vector<16x128xf32>
    %117 = arith.addf %113, %116 : vector<16x128xf32>
    %118 = math.tanh %117 : vector<16x128xf32>
    %119 = arith.negf %117 : vector<16x128xf32>
    %120 = math.exp %119 : vector<16x128xf32>
    %cst_73 = arith.constant 1.000000e+00 : f32
    %121 = vector.broadcast %cst_73 : f32 to vector<16x128xf32>
    %122 = arith.addf %121, %120 : vector<16x128xf32>
    %123 = arith.divf %121, %122 : vector<16x128xf32>
    %124 = arith.mulf %118, %123 : vector<16x128xf32>
    %c3_74 = arith.constant 3 : index
    %c0_75 = arith.constant 0 : index
    %c0_76 = arith.constant 0 : index
    %125 = vector.load %arg6[%c3_74, %c0_75, %c0_76] : memref<5x128x256xf32, #tpu.memory_space<vmem>>, vector<1x128x256xf32>
    %126 = vector.shape_cast %125 : vector<1x128x256xf32> to vector<128x256xf32>
    %cst_77 = arith.constant dense<0.000000e+00> : vector<16x256xf32>
    %127 = tpu.matmul %124, %126, %cst_77 {dimension_numbers = #tpu.dot_dimension_numbers<[1], [0], [0], [1], [0, 0, 1, 1], [], []>} : vector<16x128xf32>, vector<128x256xf32>, vector<16x256xf32> -> vector<16x256xf32>
    %c3_78 = arith.constant 3 : index
    %c0_79 = arith.constant 0 : index
    %c0_80 = arith.constant 0 : index
    %128 = vector.load %arg7[%c3_78, %c0_79, %c0_80] : memref<5x1x256xf32, #tpu.memory_space<vmem>>, vector<1x1x256xf32>
    %129 = vector.shape_cast %128 : vector<1x1x256xf32> to vector<1x256xf32>
    %130 = vector.broadcast %129 : vector<1x256xf32> to vector<16x256xf32>
    %131 = arith.addf %127, %130 : vector<16x256xf32>
    %132 = vector.extract_strided_slice %131 {offsets = [0, 0], sizes = [16, 128], strides = [1, 1]} : vector<16x256xf32> to vector<16x128xf32>
    %133 = arith.addf %102, %132 : vector<16x128xf32>
    %134 = vector.extract_strided_slice %131 {offsets = [0, 128], sizes = [16, 128], strides = [1, 1]} : vector<16x256xf32> to vector<16x128xf32>
    %135 = arith.addf %104, %134 : vector<16x128xf32>
    %c16_81 = arith.constant 16 : index
    %c0_82 = arith.constant 0 : index
    %136 = vector.load %arg11[%c16_81, %c0_82] : memref<48x128xf32, #tpu.memory_space<vmem>>, vector<16x128xf32>
    tpu.vector_store %arg11[%c16_81, %c0_82], %133 {strides = array<i32>} : memref<48x128xf32, #tpu.memory_space<vmem>>, vector<16x128xf32>,
    %c0_83 = arith.constant 0 : index
    %c0_84 = arith.constant 0 : index
    %137 = vector.load %arg11[%c0_83, %c0_84] : memref<48x128xf32, #tpu.memory_space<vmem>>, vector<48x128xf32>
    %138 = vector.extract_strided_slice %137 {offsets = [0, 0], sizes = [16, 128], strides = [1, 1]} : vector<48x128xf32> to vector<16x128xf32>
    %139 = vector.extract_strided_slice %137 {offsets = [16, 0], sizes = [16, 128], strides = [1, 1]} : vector<48x128xf32> to vector<16x128xf32>
    %140 = vector.extract_strided_slice %137 {offsets = [32, 0], sizes = [16, 128], strides = [1, 1]} : vector<48x128xf32> to vector<16x128xf32>
    %141 = tpu.concatenate %138, %139, %140 in 1 : vector<16x128xf32>, vector<16x128xf32>, vector<16x128xf32> -> vector<16x384xf32>
    %c4 = arith.constant 4 : index
    %c0_85 = arith.constant 0 : index
    %c0_86 = arith.constant 0 : index
    %142 = vector.load %arg4[%c4, %c0_85, %c0_86] : memref<5x384x128xf32, #tpu.memory_space<vmem>>, vector<1x384x128xf32>
    %143 = vector.shape_cast %142 : vector<1x384x128xf32> to vector<384x128xf32>
    %cst_87 = arith.constant dense<0.000000e+00> : vector<16x128xf32>
    %144 = tpu.matmul %141, %143, %cst_87 {dimension_numbers = #tpu.dot_dimension_numbers<[1], [0], [0], [1], [0, 0, 1, 1], [], []>} : vector<16x384xf32>, vector<384x128xf32>, vector<16x128xf32> -> vector<16x128xf32>
    %c4_88 = arith.constant 4 : index
    %c0_89 = arith.constant 0 : index
    %c0_90 = arith.constant 0 : index
    %145 = vector.load %arg5[%c4_88, %c0_89, %c0_90] : memref<5x1x128xf32, #tpu.memory_space<vmem>>, vector<1x1x128xf32>
    %146 = vector.shape_cast %145 : vector<1x1x128xf32> to vector<1x128xf32>
    %147 = vector.broadcast %146 : vector<1x128xf32> to vector<16x128xf32>
    %148 = arith.addf %144, %147 : vector<16x128xf32>
    %149 = math.tanh %148 : vector<16x128xf32>
    %150 = arith.negf %148 : vector<16x128xf32>
    %151 = math.exp %150 : vector<16x128xf32>
    %cst_91 = arith.constant 1.000000e+00 : f32
    %152 = vector.broadcast %cst_91 : f32 to vector<16x128xf32>
    %153 = arith.addf %152, %151 : vector<16x128xf32>
    %154 = arith.divf %152, %153 : vector<16x128xf32>
    %155 = arith.mulf %149, %154 : vector<16x128xf32>
    %c4_92 = arith.constant 4 : index
    %c0_93 = arith.constant 0 : index
    %c0_94 = arith.constant 0 : index
    %156 = vector.load %arg6[%c4_92, %c0_93, %c0_94] : memref<5x128x256xf32, #tpu.memory_space<vmem>>, vector<1x128x256xf32>
    %157 = vector.shape_cast %156 : vector<1x128x256xf32> to vector<128x256xf32>
    %cst_95 = arith.constant dense<0.000000e+00> : vector<16x256xf32>
    %158 = tpu.matmul %155, %157, %cst_95 {dimension_numbers = #tpu.dot_dimension_numbers<[1], [0], [0], [1], [0, 0, 1, 1], [], []>} : vector<16x128xf32>, vector<128x256xf32>, vector<16x256xf32> -> vector<16x256xf32>
    %c4_96 = arith.constant 4 : index
    %c0_97 = arith.constant 0 : index
    %c0_98 = arith.constant 0 : index
    %159 = vector.load %arg7[%c4_96, %c0_97, %c0_98] : memref<5x1x256xf32, #tpu.memory_space<vmem>>, vector<1x1x256xf32>
    %160 = vector.shape_cast %159 : vector<1x1x256xf32> to vector<1x256xf32>
    %161 = vector.broadcast %160 : vector<1x256xf32> to vector<16x256xf32>
    %162 = arith.addf %158, %161 : vector<16x256xf32>
    %163 = vector.extract_strided_slice %162 {offsets = [0, 128], sizes = [16, 128], strides = [1, 1]} : vector<16x256xf32> to vector<16x128xf32>
    %164 = arith.addf %135, %163 : vector<16x128xf32>
    %cst_99 = arith.constant 0.000000e+00 : f32
    %165 = vector.broadcast %cst_99 : f32 to vector<16x128xf32>
    %166 = arith.maximumf %164, %165 : vector<16x128xf32>
    %c0_100 = arith.constant 0 : index
    %c0_101 = arith.constant 0 : index
    %167 = vector.load %arg8[%c0_100, %c0_101] : memref<128x256xf32, #tpu.memory_space<vmem>>, vector<128x256xf32>
    %cst_102 = arith.constant dense<0.000000e+00> : vector<16x256xf32>
    %168 = tpu.matmul %166, %167, %cst_102 {dimension_numbers = #tpu.dot_dimension_numbers<[1], [0], [0], [1], [0, 0, 1, 1], [], []>} : vector<16x128xf32>, vector<128x256xf32>, vector<16x256xf32> -> vector<16x256xf32>
    %c0_103 = arith.constant 0 : index
    %c0_104 = arith.constant 0 : index
    %169 = vector.load %arg9[%c0_103, %c0_104] : memref<1x256xf32, #tpu.memory_space<vmem>>, vector<1x256xf32>
    %170 = vector.broadcast %169 : vector<1x256xf32> to vector<16x256xf32>
    %171 = arith.addf %168, %170 : vector<16x256xf32>
    %cst_105 = arith.constant 0.000000e+00 : f32
    %172 = vector.broadcast %cst_105 : f32 to vector<16x256xf32>
    %173 = arith.maximumf %171, %172 : vector<16x256xf32>
    %c0_106 = arith.constant 0 : index
    %c0_107 = arith.constant 0 : index
    %c0_108 = arith.constant 0 : index
    %174 = vector.load %arg10[%c0_106, %c0_107, %c0_108] : memref<1x16x256xf32, #tpu.memory_space<vmem>>, vector<1x16x256xf32>
    %175 = vector.shape_cast %174 : vector<1x16x256xf32> to vector<16x256xf32>
    %176 = vector.shape_cast %173 : vector<16x256xf32> to vector<1x16x256xf32>
    tpu.vector_store %arg10[%c0_106, %c0_107, %c0_108], %176 {strides = array<i32>} : memref<1x16x256xf32, #tpu.memory_space<vmem>>, vector<1x16x256xf32>,
    return
  }
  func.func @transform_0(%arg0: i32) -> (i32, i32, i32) {
    %c0_i32 = arith.constant 0 : i32
    %c0_i32_0 = arith.constant 0 : i32
    %c0_i32_1 = arith.constant 0 : i32
    return %arg0, %c0_i32, %c0_i32_0 : i32, i32, i32
  }
  func.func @transform_1(%arg0: i32) -> (i32, i32) {
    %c0_i32 = arith.constant 0 : i32
    %c0_i32_0 = arith.constant 0 : i32
    %c0_i32_1 = arith.constant 0 : i32
    return %c0_i32, %c0_i32_0 : i32, i32
  }
  func.func @transform_2(%arg0: i32) -> (i32, i32) {
    %c0_i32 = arith.constant 0 : i32
    %c0_i32_0 = arith.constant 0 : i32
    %c0_i32_1 = arith.constant 0 : i32
    return %c0_i32, %c0_i32_0 : i32, i32
  }
  func.func @transform_3(%arg0: i32) -> (i32, i32, i32) {
    %c0_i32 = arith.constant 0 : i32
    %c0_i32_0 = arith.constant 0 : i32
    %c0_i32_1 = arith.constant 0 : i32
    %c0_i32_2 = arith.constant 0 : i32
    return %c0_i32, %c0_i32_0, %c0_i32_1 : i32, i32, i32
  }
  func.func @transform_4(%arg0: i32) -> (i32, i32, i32) {
    %c0_i32 = arith.constant 0 : i32
    %c0_i32_0 = arith.constant 0 : i32
    %c0_i32_1 = arith.constant 0 : i32
    %c0_i32_2 = arith.constant 0 : i32
    return %c0_i32, %c0_i32_0, %c0_i32_1 : i32, i32, i32
  }
  func.func @transform_5(%arg0: i32) -> (i32, i32, i32) {
    %c0_i32 = arith.constant 0 : i32
    %c0_i32_0 = arith.constant 0 : i32
    %c0_i32_1 = arith.constant 0 : i32
    %c0_i32_2 = arith.constant 0 : i32
    return %c0_i32, %c0_i32_0, %c0_i32_1 : i32, i32, i32
  }
  func.func @transform_6(%arg0: i32) -> (i32, i32, i32) {
    %c0_i32 = arith.constant 0 : i32
    %c0_i32_0 = arith.constant 0 : i32
    %c0_i32_1 = arith.constant 0 : i32
    %c0_i32_2 = arith.constant 0 : i32
    return %c0_i32, %c0_i32_0, %c0_i32_1 : i32, i32, i32
  }
  func.func @transform_7(%arg0: i32) -> (i32, i32) {
    %c0_i32 = arith.constant 0 : i32
    %c0_i32_0 = arith.constant 0 : i32
    %c0_i32_1 = arith.constant 0 : i32
    return %c0_i32, %c0_i32_0 : i32, i32
  }
  func.func @transform_8(%arg0: i32) -> (i32, i32) {
    %c0_i32 = arith.constant 0 : i32
    %c0_i32_0 = arith.constant 0 : i32
    %c0_i32_1 = arith.constant 0 : i32
    return %c0_i32, %c0_i32_0 : i32, i32
  }
  func.func @transform_9(%arg0: i32) -> (i32, i32, i32) {
    %c0_i32 = arith.constant 0 : i32
    %c0_i32_0 = arith.constant 0 : i32
    %c0_i32_1 = arith.constant 0 : i32
    return %arg0, %c0_i32, %c0_i32_0 : i32, i32, i32
  }
}

</mosaic_0001>

<llo_original>
// kernel: tpu_custom_call.1
$region0: #{tpu_custom_call.1}
  #allocation0 [shape = 'u32[]', space=smem, size = 0x4, offset = 0x4, fixed_abs, tag = 'smem constant byte address 0x4 - core index']
  #allocation1 [shape = 'u32[144,128]{1,0:T(1,128)}', space=vmem, size = 0x12000, scoped, tag = 'internal scratch']
  #allocation2 [shape = 'f32[48,128]{1,0:T(8,128)}', space=vmem, size = 0x6000, scoped, tag = 'scratch operand']
  %s0 = inlined_call_operand.vmem [shape: f32[2,16,1], index: 0, kind: input, shape index: {}]
  %s1 = inlined_call_operand.vmem [shape: f32[1,128], index: 1, kind: input, shape index: {}]
  %s2 = inlined_call_operand.vmem [shape: f32[1,128], index: 2, kind: input, shape index: {}]
  %s3 = inlined_call_operand.hbm [shape: f32[5,384,128], index: 3, kind: input, shape index: {}]
  %s4 = inlined_call_operand.vmem [shape: f32[5,1,128], index: 4, kind: input, shape index: {}]
  %s5 = inlined_call_operand.hbm [shape: f32[5,128,256], index: 5, kind: input, shape index: {}]
  %s6 = inlined_call_operand.vmem [shape: f32[5,1,256], index: 6, kind: input, shape index: {}]
  %s7 = inlined_call_operand.hbm [shape: f32[128,256], index: 7, kind: input, shape index: {}]
  %s8 = inlined_call_operand.vmem [shape: f32[1,256], index: 8, kind: input, shape index: {}]
  %s9 = inlined_call_operand.hbm [shape: f32[2,16,256], index: 9, kind: output, shape index: {}]
  %s10 = sld [smem:[#allocation0]]
  $region81: #{tpu_custom_call.1} parent=0
    _
  %s12 = ssub.s32 1, %s10
  %s13 = scalar_select 0, %s12, %s10
  $region1: #{tpu_custom_call.1} parent=0
    #allocation3 [shape = 'u8[983040]{0}', space=vmem, size = 0xf0000, scoped, tag = 'input window, operand 3, single buffered']
    #allocation4 [shape = 's32[2]{0}', space=sflag, size = 0x8, scoped, tag = 'scoped memory for tpu_custom_call.1']
    #allocation5 [shape = 's32[2]{0}', space=sflag, size = 0x8, scoped, tag = 'scoped memory for tpu_custom_call.1']
    #allocation6 [shape = 'u8[655360]{0}', space=vmem, size = 0xa0000, scoped, tag = 'input window, operand 5, single buffered']
    #allocation7 [shape = 's32[1]{0}', space=sflag, size = 0x4, scoped, tag = 'scoped memory for tpu_custom_call.1']
    #allocation8 [shape = 'u8[131072]{0}', space=vmem, size = 0x20000, scoped, tag = 'input window, operand 7, single buffered']
    #allocation9 [shape = 'u8[32768]{0}', space=vmem, size = 0x8000, scoped, tag = 'output window, operand 0']
    %14 = vsyncpa [#allocation4], 0
    %15 = vsyncpa [#allocation7], 0
    %16 = vsyncpa [#allocation5], 0
    %s17 = scalar_lea.sflag [#allocation5], 1
    %18 = vsyncpa %s17, 0
    loop: start=0, step=1, limit=4
    $region2: #{tpu_custom_call.1} parent=1 // loop_pre_header
      _
    $region3: #{tpu_custom_call.1} parent=1 // loop_header
      %s20 = sphi 0, %s24
      %p21 = scmp.ge.s32.totalorder %s20, 4
      %s30 = sphi 0, %s32
      %s33 = sphi 0, %s30
      %s34 = sphi 0, %s33
      %s50 = sphi 0, %s34
      %s54 = sphi 0, %s54
      %s56 = sphi 0, %s54
      %s57 = sphi 0, %s56
      %s71 = sphi 0, %s57
      %s75 = sphi 0, %s75
      %s77 = sphi 0, %s75
      %s78 = sphi 0, %s77
      %s92 = sphi 0, %s78
      %s96 = sphi 0, %s96
      %s98 = sphi 0, %s96
      %s99 = sphi 0, %s98
      %s113 = sphi 0, %s99
      %s117 = sphi 0, %s117
      %s119 = sphi 0, %s117
      %s120 = sphi 0, %s119
      %s134 = sphi 0, %s120
      %s138 = sphi 0, %s138
      %s140 = sphi 0, %s138
      %s141 = sphi 0, %s140
      %s155 = sphi 0, %s141
      %s159 = sphi 0, %s159
      %s161 = sphi 0, %s159
      %s162 = sphi 0, %s161
      %s176 = sphi 0, %s162
      %s180 = sphi 0, %s180
      %s182 = sphi 0, %s180
      %s183 = sphi 0, %s182
      %s197 = sphi 0, %s183
      %s201 = sphi 0, %s201
      %s203 = sphi 0, %s201
      %s204 = sphi 0, %s203
      %s218 = sphi 0, %s204
      %s224 = sphi 0, %s226
      %s227 = sphi 0, %s224
      %s228 = sphi 0, %s227
      %s244 = sphi 0, %s228
    $region4: #{tpu_custom_call.1} parent=1 // loop_header_branch
      %23 = sbr.rel (%p21) target = $region8
    $region5: #{tpu_custom_call.1} parent=1 // loop_body
      %s25 = ssub.s32 %s20, 1
      %s26 = ssub.s32 %s20, 2
      %s27 = sadd.s32 %s20, 1
      %s28 = ssub.s32 %s20, %s27
      %p29 = scmp.eq.s32.totalorder %s28, 0
      %s31 = sadd.s32 %s30, 1
      %s32 = scalar_select %p29, %s30, %s31
      %p35 = pneg %p29
      %p36 = scmp.eq.s32.totalorder %s20, 1
      %p37 = por %p35, %p36
      %p38 = scmp.ne.s32.totalorder %s30, %s33
      %p39 = scmp.eq.s32.totalorder %s20, 0
      %p40 = por %p38, %p39
      %p41 = scmp.ne.s32.totalorder %s30, %s33
      %p42 = scmp.eq.s32.totalorder %s25, 1
      %p43 = por %p41, %p42
      %p44 = scmp.ne.s32.totalorder %s33, %s34
      %p45 = scmp.eq.s32.totalorder %s25, 0
      %p46 = por %p44, %p45
      %p47 = scmp.ne.s32.totalorder %s33, %s34
      %p48 = scmp.eq.s32.totalorder %s26, 1
      %p49 = por %p47, %p48
      %p51 = scmp.ne.s32.totalorder %s34, %s50
      %p52 = scmp.eq.s32.totalorder %s26, 0
      %p53 = por %p51, %p52
      %s55 = sadd.s32 %s54, 1
      %p58 = scmp.eq.s32.totalorder %s20, 1
      %p59 = scmp.ne.s32.totalorder %s54, %s56
      %p60 = scmp.eq.s32.totalorder %s20, 0
      %p61 = por %p59, %p60
      %p62 = scmp.ne.s32.totalorder %s54, %s56
      %p63 = scmp.eq.s32.totalorder %s25, 1
      %p64 = por %p62, %p63
      %p65 = scmp.ne.s32.totalorder %s56, %s57
      %p66 = scmp.eq.s32.totalorder %s25, 0
      %p67 = por %p65, %p66
      %p68 = scmp.ne.s32.totalorder %s56, %s57
      %p69 = scmp.eq.s32.totalorder %s26, 1
      %p70 = por %p68, %p69
      %p72 = scmp.ne.s32.totalorder %s57, %s71
      %p73 = scmp.eq.s32.totalorder %s26, 0
      %p74 = por %p72, %p73
      %s76 = sadd.s32 %s75, 1
      %p79 = scmp.eq.s32.totalorder %s20, 1
      %p80 = scmp.ne.s32.totalorder %s75, %s77
      %p81 = scmp.eq.s32.totalorder %s20, 0
      %p82 = por %p80, %p81
      %p83 = scmp.ne.s32.totalorder %s75, %s77
      %p84 = scmp.eq.s32.totalorder %s25, 1
      %p85 = por %p83, %p84
      %p86 = scmp.ne.s32.totalorder %s77, %s78
      %p87 = scmp.eq.s32.totalorder %s25, 0
      %p88 = por %p86, %p87
      %p89 = scmp.ne.s32.totalorder %s77, %s78
      %p90 = scmp.eq.s32.totalorder %s26, 1
      %p91 = por %p89, %p90
      %p93 = scmp.ne.s32.totalorder %s78, %s92
      %p94 = scmp.eq.s32.totalorder %s26, 0
      %p95 = por %p93, %p94
      %s97 = sadd.s32 %s96, 1
      %p100 = scmp.eq.s32.totalorder %s20, 1
      %p101 = scmp.ne.s32.totalorder %s96, %s98
      %p102 = scmp.eq.s32.totalorder %s20, 0
      %p103 = por %p101, %p102
      %p104 = scmp.ne.s32.totalorder %s96, %s98
      %p105 = scmp.eq.s32.totalorder %s25, 1
      %p106 = por %p104, %p105
      %p107 = scmp.ne.s32.totalorder %s98, %s99
      %p108 = scmp.eq.s32.totalorder %s25, 0
      %p109 = por %p107, %p108
      %p110 = scmp.ne.s32.totalorder %s98, %s99
      %p111 = scmp.eq.s32.totalorder %s26, 1
      %p112 = por %p110, %p111
      %p114 = scmp.ne.s32.totalorder %s99, %s113
      %p115 = scmp.eq.s32.totalorder %s26, 0
      %p116 = por %p114, %p115
      %s118 = sadd.s32 %s117, 1
      %p121 = scmp.eq.s32.totalorder %s20, 1
      %p122 = scmp.ne.s32.totalorder %s117, %s119
      %p123 = scmp.eq.s32.totalorder %s20, 0
      %p124 = por %p122, %p123
      %p125 = scmp.ne.s32.totalorder %s117, %s119
      %p126 = scmp.eq.s32.totalorder %s25, 1
      %p127 = por %p125, %p126
      %p128 = scmp.ne.s32.totalorder %s119, %s120
      %p129 = scmp.eq.s32.totalorder %s25, 0
      %p130 = por %p128, %p129
      %p131 = scmp.ne.s32.totalorder %s119, %s120
      %p132 = scmp.eq.s32.totalorder %s26, 1
      %p133 = por %p131, %p132
      %p135 = scmp.ne.s32.totalorder %s120, %s134
      %p136 = scmp.eq.s32.totalorder %s26, 0
      %p137 = por %p135, %p136
      %s139 = sadd.s32 %s138, 1
      %p142 = scmp.eq.s32.totalorder %s20, 1
      %p143 = scmp.ne.s32.totalorder %s138, %s140
      %p144 = scmp.eq.s32.totalorder %s20, 0
      %p145 = por %p143, %p144
      %p146 = scmp.ne.s32.totalorder %s138, %s140
      %p147 = scmp.eq.s32.totalorder %s25, 1
      %p148 = por %p146, %p147
      %p149 = scmp.ne.s32.totalorder %s140, %s141
      %p150 = scmp.eq.s32.totalorder %s25, 0
      %p151 = por %p149, %p150
      %p152 = scmp.ne.s32.totalorder %s140, %s141
      %p153 = scmp.eq.s32.totalorder %s26, 1
      %p154 = por %p152, %p153
      %p156 = scmp.ne.s32.totalorder %s141, %s155
      %p157 = scmp.eq.s32.totalorder %s26, 0
      %p158 = por %p156, %p157
      %s160 = sadd.s32 %s159, 1
      %p163 = scmp.eq.s32.totalorder %s20, 1
      %p164 = scmp.ne.s32.totalorder %s159, %s161
      %p165 = scmp.eq.s32.totalorder %s20, 0
      %p166 = por %p164, %p165
      %p167 = scmp.ne.s32.totalorder %s159, %s161
      %p168 = scmp.eq.s32.totalorder %s25, 1
      %p169 = por %p167, %p168
      %p170 = scmp.ne.s32.totalorder %s161, %s162
      %p171 = scmp.eq.s32.totalorder %s25, 0
      %p172 = por %p170, %p171
      %p173 = scmp.ne.s32.totalorder %s161, %s162
      %p174 = scmp.eq.s32.totalorder %s26, 1
      %p175 = por %p173, %p174
      %p177 = scmp.ne.s32.totalorder %s162, %s176
      %p178 = scmp.eq.s32.totalorder %s26, 0
      %p179 = por %p177, %p178
      %s181 = sadd.s32 %s180, 1
      %p184 = scmp.eq.s32.totalorder %s20, 1
      %p185 = scmp.ne.s32.totalorder %s180, %s182
      %p186 = scmp.eq.s32.totalorder %s20, 0
      %p187 = por %p185, %p186
      %p188 = scmp.ne.s32.totalorder %s180, %s182
      %p189 = scmp.eq.s32.totalorder %s25, 1
      %p190 = por %p188, %p189
      %p191 = scmp.ne.s32.totalorder %s182, %s183
      %p192 = scmp.eq.s32.totalorder %s25, 0
      %p193 = por %p191, %p192
      %p194 = scmp.ne.s32.totalorder %s182, %s183
      %p195 = scmp.eq.s32.totalorder %s26, 1
      %p196 = por %p194, %p195
      %p198 = scmp.ne.s32.totalorder %s183, %s197
      %p199 = scmp.eq.s32.totalorder %s26, 0
      %p200 = por %p198, %p199
      %s202 = sadd.s32 %s201, 1
      %p205 = scmp.eq.s32.totalorder %s20, 1
      %p206 = scmp.ne.s32.totalorder %s201, %s203
      %p207 = scmp.eq.s32.totalorder %s20, 0
      %p208 = por %p206, %p207
      %p209 = scmp.ne.s32.totalorder %s201, %s203
      %p210 = scmp.eq.s32.totalorder %s25, 1
      %p211 = por %p209, %p210
      %p212 = scmp.ne.s32.totalorder %s203, %s204
      %p213 = scmp.eq.s32.totalorder %s25, 0
      %p214 = por %p212, %p213
      %p215 = scmp.ne.s32.totalorder %s203, %s204
      %p216 = scmp.eq.s32.totalorder %s26, 1
      %p217 = por %p215, %p216
      %p219 = scmp.ne.s32.totalorder %s204, %s218
      %p220 = scmp.eq.s32.totalorder %s26, 0
      %p221 = por %p219, %p220
      %s222 = ssub.s32 %s20, %s27
      %p223 = scmp.eq.s32.totalorder %s222, 0
      %s225 = sadd.s32 %s224, 1
      %s226 = scalar_select %p223, %s224, %s225
      %p229 = pneg %p223
      %p230 = scmp.eq.s32.totalorder %s20, 1
      %p231 = por %p229, %p230
      %p232 = scmp.ne.s32.totalorder %s224, %s227
      %p233 = scmp.eq.s32.totalorder %s20, 0
      %p234 = por %p232, %p233
      %p235 = scmp.ne.s32.totalorder %s224, %s227
      %p236 = scmp.eq.s32.totalorder %s25, 1
      %p237 = por %p235, %p236
      %p238 = scmp.ne.s32.totalorder %s227, %s228
      %p239 = scmp.eq.s32.totalorder %s25, 0
      %p240 = por %p238, %p239
      %p241 = scmp.ne.s32.totalorder %s227, %s228
      %p242 = scmp.eq.s32.totalorder %s26, 1
      %p243 = por %p241, %p242
      %p245 = scmp.ne.s32.totalorder %s228, %s244
      %p246 = scmp.eq.s32.totalorder %s26, 0
      %p247 = por %p245, %p246
      %p248 = scmp.le.s32.totalorder 1, %s20
      %p249 = scmp.lt.s32.totalorder %s20, 3
      %p250 = pnand %p248, %p249
      %p251 = pneg %p250
      // Predicated region
      $region9: #{tpu_custom_call.1} parent=5 // pred_check
        _
      $region10: #{tpu_custom_call.1} parent=5 // pred_check_branch
        %253 = sbr.rel (%p250) target = $region12
      $region11: #{tpu_custom_call.1} parent=5 // pred_region
        %s254 = ssub.s32 %s20, 1
        // Predicated region
        $region13: #{tpu_custom_call.1} parent=11 // pred_check
          %p255 = pneg %p67
        $region14: #{tpu_custom_call.1} parent=11 // pred_check_branch
          %257 = sbr.rel (%p255) target = $region16
        $region15: #{tpu_custom_call.1} parent=11 // pred_region
          _
        $region16: #{tpu_custom_call.1} parent=11 // pred_fallthru
          _
        // Predicated region
        $region17: #{tpu_custom_call.1} parent=11 // pred_check
          %p258 = pneg %p88
        $region18: #{tpu_custom_call.1} parent=11 // pred_check_branch
          %260 = sbr.rel (%p258) target = $region20
        $region19: #{tpu_custom_call.1} parent=11 // pred_region
          _
        $region20: #{tpu_custom_call.1} parent=11 // pred_fallthru
          _
        // Predicated region
        $region21: #{tpu_custom_call.1} parent=11 // pred_check
          %p261 = pneg %p109
        $region22: #{tpu_custom_call.1} parent=11 // pred_check_branch
          %263 = sbr.rel (%p261) target = $region24
        $region23: #{tpu_custom_call.1} parent=11 // pred_region
          %s265 = ssub.s32 30720, 30720
          %266 = vsyncadd [#allocation4], %s265
          %s267 = sshll.u32 [#allocation3], 4
          %s268 = int_to_ptr.vmem [resolvable:$true] %s267
          %273 = dma.hbm_to_vmem [thread:$0]  %s3, 30720, %s268, [#allocation4], 128, 128, 8
        $region24: #{tpu_custom_call.1} parent=11 // pred_fallthru
          _
        // Predicated region
        $region25: #{tpu_custom_call.1} parent=11 // pred_check
          %p274 = pneg %p130
        $region26: #{tpu_custom_call.1} parent=11 // pred_check_branch
          %276 = sbr.rel (%p274) target = $region28
        $region27: #{tpu_custom_call.1} parent=11 // pred_region
          _
        $region28: #{tpu_custom_call.1} parent=11 // pred_fallthru
          _
        // Predicated region
        $region29: #{tpu_custom_call.1} parent=11 // pred_check
          %p277 = pneg %p151
        $region30: #{tpu_custom_call.1} parent=11 // pred_check_branch
          %279 = sbr.rel (%p277) target = $region32
        $region31: #{tpu_custom_call.1} parent=11 // pred_region
          %s281 = ssub.s32 20480, 20480
          %282 = vsyncadd [#allocation7], %s281
          %s283 = sshll.u32 [#allocation6], 4
          %s284 = int_to_ptr.vmem [resolvable:$true] %s283
          %289 = dma.hbm_to_vmem [thread:$0]  %s5, 20480, %s284, [#allocation7], 256, 256, 16
        $region32: #{tpu_custom_call.1} parent=11 // pred_fallthru
          _
        // Predicated region
        $region33: #{tpu_custom_call.1} parent=11 // pred_check
          %p290 = pneg %p172
        $region34: #{tpu_custom_call.1} parent=11 // pred_check_branch
          %292 = sbr.rel (%p290) target = $region36
        $region35: #{tpu_custom_call.1} parent=11 // pred_region
          _
        $region36: #{tpu_custom_call.1} parent=11 // pred_fallthru
          _
        // Predicated region
        $region37: #{tpu_custom_call.1} parent=11 // pred_check
          %p293 = pneg %p193
        $region38: #{tpu_custom_call.1} parent=11 // pred_check_branch
          %295 = sbr.rel (%p293) target = $region40
        $region39: #{tpu_custom_call.1} parent=11 // pred_region
          %s297 = ssub.s32 4096, 4096
          %298 = vsyncadd [#allocation7], %s297
          %s299 = sshll.u32 [#allocation8], 4
          %s300 = int_to_ptr.vmem [resolvable:$true] %s299
          %305 = dma.hbm_to_vmem [thread:$0]  %s7, 4096, %s300, [#allocation7], 256, 256, 16
        $region40: #{tpu_custom_call.1} parent=11 // pred_fallthru
          _
        // Predicated region
        $region41: #{tpu_custom_call.1} parent=11 // pred_check
          %p306 = pneg %p214
        $region42: #{tpu_custom_call.1} parent=11 // pred_check_branch
          %308 = sbr.rel (%p306) target = $region44
        $region43: #{tpu_custom_call.1} parent=11 // pred_region
          _
        $region44: #{tpu_custom_call.1} parent=11 // pred_fallthru
          _
      $region12: #{tpu_custom_call.1} parent=5 // pred_fallthru
        _
      %p309 = scmp.lt.s32.totalorder %s20, 2
      // Predicated region
      $region45: #{tpu_custom_call.1} parent=5 // pred_check
        %p310 = pneg %p309
      $region46: #{tpu_custom_call.1} parent=5 // pred_check_branch
        %312 = sbr.rel (%p310) target = $region48
      $region47: #{tpu_custom_call.1} parent=5 // pred_region
        // Predicated region
        $region49: #{tpu_custom_call.1} parent=47 // pred_check
          %p313 = pneg %p40
        $region50: #{tpu_custom_call.1} parent=47 // pred_check_branch
          %315 = sbr.rel (%p313) target = $region52
        $region51: #{tpu_custom_call.1} parent=47 // pred_region
          %p316 = scmp.lt.s32.totalorder %s20, 1
          %s317 = scalar_select %p316, %s20, 1
          %s318 = smul.addr %s317, 2
          %s319 = smul.addr %s318, 8
          %s320 = scalar_lea.vmem %s0, %s319
        $region52: #{tpu_custom_call.1} parent=47 // pred_fallthru
          _
      $region48: #{tpu_custom_call.1} parent=5 // pred_fallthru
        _
      %p321 = scmp.le.s32.totalorder 1, %s20
      %p322 = scmp.lt.s32.totalorder %s20, 3
      %p323 = pnand %p321, %p322
      %p324 = pneg %p323
      // Predicated region
      $region53: #{tpu_custom_call.1} parent=5 // pred_check
        _
      $region54: #{tpu_custom_call.1} parent=5 // pred_check_branch
        %326 = sbr.rel (%p323) target = $region56
      $region55: #{tpu_custom_call.1} parent=5 // pred_region
        %s327 = ssub.s32 %s20, 1
        // Predicated region
        $region57: #{tpu_custom_call.1} parent=55 // pred_check
          %p328 = pneg %p109
        $region58: #{tpu_custom_call.1} parent=55 // pred_check_branch
          %330 = sbr.rel (%p328) target = $region60
        $region59: #{tpu_custom_call.1} parent=55 // pred_region
          %331 = dma.done [#allocation4], 30720
        $region60: #{tpu_custom_call.1} parent=55 // pred_fallthru
          _
        // Predicated region
        $region61: #{tpu_custom_call.1} parent=55 // pred_check
          %p332 = pneg %p151
        $region62: #{tpu_custom_call.1} parent=55 // pred_check_branch
          %334 = sbr.rel (%p332) target = $region64
        $region63: #{tpu_custom_call.1} parent=55 // pred_region
          %335 = dma.done [#allocation7], 20480
        $region64: #{tpu_custom_call.1} parent=55 // pred_fallthru
          _
        // Predicated region
        $region65: #{tpu_custom_call.1} parent=55 // pred_check
          %p336 = pneg %p193
        $region66: #{tpu_custom_call.1} parent=55 // pred_check_branch
          %338 = sbr.rel (%p336) target = $region68
        $region67: #{tpu_custom_call.1} parent=55 // pred_region
          %339 = dma.done [#allocation7], 4096
        $region68: #{tpu_custom_call.1} parent=55 // pred_fallthru
          _
        %p340 = scmp.lt.s32.totalorder %s25, 1
        %s341 = scalar_select %p340, %s25, 1
        %s342 = smul.addr %s341, 2
        %s343 = smul.addr %s342, 8
        %s344 = scalar_lea.vmem %s0, %s343
        %p345 = pneg %p46
        %p346 = pneg %p43
        %p347 = pneg %p67
        %p348 = pneg %p64
        %p349 = pneg %p88
        %p350 = pneg %p85
        %p351 = pneg %p109
        %p352 = pneg %p106
        %p353 = pneg %p130
        %p354 = pneg %p127
        %p355 = pneg %p151
        %p356 = pneg %p148
        %p357 = pneg %p172
        %p358 = pneg %p169
        %p359 = pneg %p193
        %p360 = pneg %p190
        %p361 = pneg %p214
        %p362 = pneg %p211
        %p363 = pneg %p240
        %p364 = pneg %p237
        %s365 = sand.u32 %s227, 1
        %s366 = scalar_lea.sflag [#allocation5], %s365
        %s367 = sand.u32 %s227, 1
        %s368 = smul.addr %s367, 32
        %s369 = scalar_lea.vmem [#allocation9], %s368
        %p370 = scmp.lt.s32.totalorder %s25, 1
        %s371 = scalar_select %p370, %s25, 1
        %s372 = smul.addr %s371, 2
        %s373 = smul.addr %s372, 8
        %s374 = scalar_lea.vmem %s0, %s373
        %375 = vst [vmem:[#allocation2] sm:$0xff] 0.0
        %376 = vst [vmem:[#allocation2 + $0x8] sm:$0xff] 0.0
        %377 = vst [vmem:[#allocation2 + $0x10] sm:$0xff] 0.0
        %378 = vst [vmem:[#allocation2 + $0x18] sm:$0xff] 0.0
        %379 = vst [vmem:[#allocation2 + $0x20] sm:$0xff] 0.0
        %380 = vst [vmem:[#allocation2 + $0x28] sm:$0xff] 0.0
        %v381 = vld [vmem:[%s374] sm:$0xff]
        %v382 = vld [vmem:[%s374 + $0x8] sm:$0xff]
        %v383 = vld [vmem:[%s1] sm:$0x1]
        %385 = vset.pattern.permute.xlu0 0
        %386 = vperm.xlu0 %385, %v381
        %v387 = vpop.permute.xlu0 %386
        %390 = vset.pattern.permute.xlu0 0
        %391 = vperm.xlu0 %390, %v382
        %v392 = vpop.permute.xlu0 %391
        %v395 = vlaneseq
        %v396 = vshrl.u32 %v395, 7
        %v397 = vsub.s32 0, %v396
        %v398 = vrot.slane %v383, %v397
        %v400 = vmul.f32 %v387, %v398
        %v401 = vmul.f32 %v392, %v398
        %v402 = vld [vmem:[%s2] sm:$0x1]
        %v404 = vlaneseq
        %v405 = vshrl.u32 %v404, 7
        %v406 = vsub.s32 0, %v405
        %v407 = vrot.slane %v402, %v406
        %v409 = vadd.f32 %v400, %v407
        %v410 = vadd.f32 %v401, %v407
        %411 = vst [vmem:[#allocation2 + $0x10] sm:$0xff] %v409
        %412 = vst [vmem:[#allocation2 + $0x18] sm:$0xff] %v410
        %v413 = vld [vmem:[#allocation2 + $0x8] sm:$0xff]
        %v414 = vld [vmem:[#allocation2 + $0x10] sm:$0xff]
        %v415 = vld [vmem:[#allocation2 + $0x18] sm:$0xff]
        %v416 = vld [vmem:[#allocation2 + $0x20] sm:$0xff]
        %vm419 = vcmask 1046528
        %v420 = vrot.slane %v414, 1
        %v421 = vrot.slane %v415, 1
        %v422 = vsel %vm419, %v420, %v421
        %vm424 = vcmask 1045504
        %v425 = vrot.slane %v414, 2
        %v426 = vrot.slane %v415, 2
        %v427 = vsel %vm424, %v425, %v426
        %v428 = vrot.slane %v416, 2
        %v429 = vsel %vm424, %v426, %v428
        %v430 = vld [vmem:[#allocation3] sm:$0xff]
        %v431 = vld [vmem:[#allocation3 + $0x8] sm:$0xff]
        %v432 = vld [vmem:[#allocation3 + $0x10] sm:$0xff]
        %v433 = vld [vmem:[#allocation3 + $0x18] sm:$0xff]
        %v434 = vld [vmem:[#allocation3 + $0x20] sm:$0xff]
        %v435 = vld [vmem:[#allocation3 + $0x28] sm:$0xff]
        %v436 = vld [vmem:[#allocation3 + $0x30] sm:$0xff]
        %v437 = vld [vmem:[#allocation3 + $0x38] sm:$0xff]
        %v438 = vld [vmem:[#allocation3 + $0x40] sm:$0xff]
        %v439 = vld [vmem:[#allocation3 + $0x48] sm:$0xff]
        %v440 = vld [vmem:[#allocation3 + $0x50] sm:$0xff]
        %v441 = vld [vmem:[#allocation3 + $0x58] sm:$0xff]
        %v442 = vld [vmem:[#allocation3 + $0x60] sm:$0xff]
        %v443 = vld [vmem:[#allocation3 + $0x68] sm:$0xff]
        %v444 = vld [vmem:[#allocation3 + $0x70] sm:$0xff]
        %v445 = vld [vmem:[#allocation3 + $0x78] sm:$0xff]
        %v446 = vld [vmem:[#allocation3 + $0x80] sm:$0xff]
        %v447 = vld [vmem:[#allocation3 + $0x88] sm:$0xff]
        %v448 = vld [vmem:[#allocation3 + $0x90] sm:$0xff]
        %v449 = vld [vmem:[#allocation3 + $0x98] sm:$0xff]
        %v450 = vld [vmem:[#allocation3 + $0xa0] sm:$0xff]
        %v451 = vld [vmem:[#allocation3 + $0xa8] sm:$0xff]
        %v452 = vld [vmem:[#allocation3 + $0xb0] sm:$0xff]
        %v453 = vld [vmem:[#allocation3 + $0xb8] sm:$0xff]
        %v454 = vld [vmem:[#allocation3 + $0xc0] sm:$0xff]
        %v455 = vld [vmem:[#allocation3 + $0xc8] sm:$0xff]
        %v456 = vld [vmem:[#allocation3 + $0xd0] sm:$0xff]
        %v457 = vld [vmem:[#allocation3 + $0xd8] sm:$0xff]
        %v458 = vld [vmem:[#allocation3 + $0xe0] sm:$0xff]
        %v459 = vld [vmem:[#allocation3 + $0xe8] sm:$0xff]
        %v460 = vld [vmem:[#allocation3 + $0xf0] sm:$0xff]
        %v461 = vld [vmem:[#allocation3 + $0xf8] sm:$0xff]
        %v462 = vld [vmem:[#allocation3 + $0x100] sm:$0xff]
        %v463 = vld [vmem:[#allocation3 + $0x108] sm:$0xff]
        %v464 = vld [vmem:[#allocation3 + $0x110] sm:$0xff]
        %v465 = vld [vmem:[#allocation3 + $0x118] sm:$0xff]
        %v466 = vld [vmem:[#allocation3 + $0x120] sm:$0xff]
        %v467 = vld [vmem:[#allocation3 + $0x128] sm:$0xff]
        %v468 = vld [vmem:[#allocation3 + $0x130] sm:$0xff]
        %v469 = vld [vmem:[#allocation3 + $0x138] sm:$0xff]
        %v470 = vld [vmem:[#allocation3 + $0x140] sm:$0xff]
        %v471 = vld [vmem:[#allocation3 + $0x148] sm:$0xff]
        %v472 = vld [vmem:[#allocation3 + $0x150] sm:$0xff]
        %v473 = vld [vmem:[#allocation3 + $0x158] sm:$0xff]
        %v474 = vld [vmem:[#allocation3 + $0x160] sm:$0xff]
        %v475 = vld [vmem:[#allocation3 + $0x168] sm:$0xff]
        %v476 = vld [vmem:[#allocation3 + $0x170] sm:$0xff]
        %v477 = vld [vmem:[#allocation3 + $0x178] sm:$0xff]
        %v478 = vld [vmem:[%s4] sm:$0x1]
        %v480 = vlaneseq
        %v481 = vshrl.u32 %v480, 7
        %v482 = vsub.s32 0, %v481
        %v483 = vrot.slane %v478, %v482
        %vm486 = vcmask 1040384
        %v487 = vrot.slane %v413, 7
        %v488 = vrot.slane %v414, 7
        %v489 = vsel %vm486, %v487, %v488
        %v490 = vrot.slane %v420, 7
        %v491 = vrot.slane %v422, 7
        %v492 = vsel %vm486, %v490, %v491
        %v493 = vrot.slane %v425, 7
        %v494 = vrot.slane %v427, 7
        %v495 = vsel %vm486, %v493, %v494
        %v496 = vrot.slane %v415, 7
        %v497 = vsel %vm486, %v488, %v496
        %v498 = vrot.slane %v421, 7
        %v499 = vsel %vm486, %v491, %v498
        %v500 = vrot.slane %v429, 7
        %v501 = vsel %vm486, %v494, %v500
        %508 = vmatprep.subr.mxu0 0.0
        %509 = vmatpush1.msra.mxu0 %v445
        %510 = vmatprep.subr.mxu0 0.0
        %511 = vmatpush1.msra.mxu0 %v444
        %512 = vmatprep.subr.mxu0 0.0
        %513 = vmatpush1.msra.mxu0 %v443
        %514 = vmatprep.subr.mxu0 0.0
        %515 = vmatpush1.msra.mxu0 %v442
        %516 = vmatprep.subr.mxu0 0.0
        %517 = vmatpush1.msra.mxu0 %v441
        %518 = vmatprep.subr.mxu0 0.0
        %519 = vmatpush1.msra.mxu0 %v440
        %520 = vmatprep.subr.mxu0 0.0
        %521 = vmatpush1.msra.mxu0 %v439
        %522 = vmatprep.subr.mxu0 0.0
        %523 = vmatpush1.msra.mxu0 %v438
        %524 = vmatprep.subr.mxu0 0.0
        %525 = vmatpush1.msra.mxu0 %v437
        %526 = vmatprep.subr.mxu0 0.0
        %527 = vmatpush1.msra.mxu0 %v436
        %528 = vmatprep.subr.mxu0 0.0
        %529 = vmatpush1.msra.mxu0 %v435
        %530 = vmatprep.subr.mxu0 0.0
        %531 = vmatpush1.msra.mxu0 %v434
        %532 = vmatprep.subr.mxu0 0.0
        %533 = vmatpush1.msra.mxu0 %v433
        %534 = vmatprep.subr.mxu0 0.0
        %535 = vmatpush1.msra.mxu0 %v432
        %536 = vmatprep.subr.mxu0 0.0
        %537 = vmatpush1.msra.mxu0 %v431
        %538 = vmatprep.subr.mxu0 0.0
        %539 = vmatpush1.msra.mxu0 %v430
        %540 = vmatprep.subr.mxu0 0.0
        %541 = vmatpush2.msra.mxu0 %v461
        %542 = vmatprep.subr.mxu0 0.0
        %543 = vmatpush2.msra.mxu0 %v460
        %544 = vmatprep.subr.mxu0 0.0
        %545 = vmatpush2.msra.mxu0 %v459
        %546 = vmatprep.subr.mxu0 0.0
        %547 = vmatpush2.msra.mxu0 %v458
        %548 = vmatprep.subr.mxu0 0.0
        %549 = vmatpush2.msra.mxu0 %v457
        %550 = vmatprep.subr.mxu0 0.0
        %551 = vmatpush2.msra.mxu0 %v456
        %552 = vmatprep.subr.mxu0 0.0
        %553 = vmatpush2.msra.mxu0 %v455
        %554 = vmatprep.subr.mxu0 0.0
        %555 = vmatpush2.msra.mxu0 %v454
        %556 = vmatprep.subr.mxu0 0.0
        %557 = vmatpush2.msra.mxu0 %v453
        %558 = vmatprep.subr.mxu0 0.0
        %559 = vmatpush2.msra.mxu0 %v452
        %560 = vmatprep.subr.mxu0 0.0
        %561 = vmatpush2.msra.mxu0 %v451
        %562 = vmatprep.subr.mxu0 0.0
        %563 = vmatpush2.msra.mxu0 %v450
        %564 = vmatprep.subr.mxu0 0.0
        %565 = vmatpush2.msra.mxu0 %v449
        %566 = vmatprep.subr.mxu0 0.0
        %567 = vmatpush2.msra.mxu0 %v448
        %568 = vmatprep.subr.mxu0 0.0
        %569 = vmatpush2.msra.mxu0 %v447
        %570 = vmatprep.subr.mxu0 0.0
        %571 = vmatpush2.msra.mxu0 %v446
        %572 = vmatprep.mubr.f32.mxu0 %v492
        %573 = vmatmul.mubr.f32.gmra.mxu0 %v489
        %v574 = vpop.f32.mrf.mxu0
        %v575 = vadd.f32 %v483, %v574
        %v576 = vpop.f32.mrf.mxu0
        %577 = vmatprep.mubr.f32.mxu0 %v499
        %578 = vmatmul.mubr.f32.gmra.mxu0 %v497
        %v579 = vpop.f32.mrf.mxu0
        %v580 = vadd.f32 %v483, %v579
        %v581 = vpop.f32.mrf.mxu0
        %582 = vdwg.mxu0
        %583 = vmatprep.subr.mxu0 0.0
        %584 = vmatpush1.msra.mxu0 %v477
        %585 = vmatprep.subr.mxu0 0.0
        %586 = vmatpush1.msra.mxu0 %v476
        %587 = vmatprep.subr.mxu0 0.0
        %588 = vmatpush1.msra.mxu0 %v475
        %589 = vmatprep.subr.mxu0 0.0
        %590 = vmatpush1.msra.mxu0 %v474
        %591 = vmatprep.subr.mxu0 0.0
        %592 = vmatpush1.msra.mxu0 %v473
        %593 = vmatprep.subr.mxu0 0.0
        %594 = vmatpush1.msra.mxu0 %v472
        %595 = vmatprep.subr.mxu0 0.0
        %596 = vmatpush1.msra.mxu0 %v471
        %597 = vmatprep.subr.mxu0 0.0
        %598 = vmatpush1.msra.mxu0 %v470
        %599 = vmatprep.subr.mxu0 0.0
        %600 = vmatpush1.msra.mxu0 %v469
        %601 = vmatprep.subr.mxu0 0.0
        %602 = vmatpush1.msra.mxu0 %v468
        %603 = vmatprep.subr.mxu0 0.0
        %604 = vmatpush1.msra.mxu0 %v467
        %605 = vmatprep.subr.mxu0 0.0
        %606 = vmatpush1.msra.mxu0 %v466
        %607 = vmatprep.subr.mxu0 0.0
        %608 = vmatpush1.msra.mxu0 %v465
        %609 = vmatprep.subr.mxu0 0.0
        %610 = vmatpush1.msra.mxu0 %v464
        %611 = vmatprep.subr.mxu0 0.0
        %612 = vmatpush1.msra.mxu0 %v463
        %613 = vmatprep.subr.mxu0 0.0
        %614 = vmatpush1.msra.mxu0 %v462
        %615 = vmatprep.subr.mxu0 0.0
        %616 = vmatpush2.msra.mxu0 0.0
        %617 = vmatprep.subr.mxu0 0.0
        %618 = vmatpush2.msra.mxu0 0.0
        %619 = vmatprep.subr.mxu0 0.0
        %620 = vmatpush2.msra.mxu0 0.0
        %621 = vmatprep.subr.mxu0 0.0
        %622 = vmatpush2.msra.mxu0 0.0
        %623 = vmatprep.subr.mxu0 0.0
        %624 = vmatpush2.msra.mxu0 0.0
        %625 = vmatprep.subr.mxu0 0.0
        %626 = vmatpush2.msra.mxu0 0.0
        %627 = vmatprep.subr.mxu0 0.0
        %628 = vmatpush2.msra.mxu0 0.0
        %629 = vmatprep.subr.mxu0 0.0
        %630 = vmatpush2.msra.mxu0 0.0
        %631 = vmatprep.subr.mxu0 0.0
        %632 = vmatpush2.msra.mxu0 0.0
        %633 = vmatprep.subr.mxu0 0.0
        %634 = vmatpush2.msra.mxu0 0.0
        %635 = vmatprep.subr.mxu0 0.0
        %636 = vmatpush2.msra.mxu0 0.0
        %637 = vmatprep.subr.mxu0 0.0
        %638 = vmatpush2.msra.mxu0 0.0
        %639 = vmatprep.subr.mxu0 0.0
        %640 = vmatpush2.msra.mxu0 0.0
        %641 = vmatprep.subr.mxu0 0.0
        %642 = vmatpush2.msra.mxu0 0.0
        %643 = vmatprep.subr.mxu0 0.0
        %644 = vmatpush2.msra.mxu0 0.0
        %645 = vmatprep.subr.mxu0 0.0
        %646 = vmatpush2.msra.mxu0 0.0
        %647 = vmatprep.mubr.f32.mxu0 0.0
        %648 = vmatmul.mubr.f32.gmra.mxu0 %v495
        %v649 = vpop.f32.mrf.mxu0
        %v650 = vadd.f32 %v575, %v649
        %v651 = vpop.f32.mrf.mxu0
        %652 = vmatprep.mubr.f32.mxu0 0.0
        %653 = vmatmul.mubr.f32.gmra.mxu0 %v501
        %v654 = vpop.f32.mrf.mxu0
        %v655 = vadd.f32 %v580, %v654
        %v656 = vpop.f32.mrf.mxu0
        %657 = vdwg.mxu0
        %v658 = vtanh.pop %v650
        %v659 = vtanh.pop %v655
        %v660 = vxor.u32 %v650, 2147483648
        %v661 = vxor.u32 %v655, 2147483648
        %v662 = vmul.f32 %v660, 1.442695
        %v663 = vpow.pop %v662
        %v664 = vmul.f32 %v661, 1.442695
        %v665 = vpow.pop %v664
        %v666 = vadd.f32 %v663, 1.0
        %v667 = vadd.f32 %v665, 1.0
        %v668 = vrcp.pop %v666
        %v669 = vmul.f32 1.0, %v668
        %v670 = vrcp.pop %v667
        %v671 = vmul.f32 1.0, %v670
        %v672 = vmul.f32 %v658, %v669
        %v673 = vmul.f32 %v659, %v671
        %v674 = vld [vmem:[#allocation6] sm:$0xff]
        %v675 = vld [vmem:[#allocation6 + $0x8] sm:$0xff]
        %v676 = vld [vmem:[#allocation6 + $0x10] sm:$0xff]
        %v677 = vld [vmem:[#allocation6 + $0x18] sm:$0xff]
        %v678 = vld [vmem:[#allocation6 + $0x20] sm:$0xff]
        %v679 = vld [vmem:[#allocation6 + $0x28] sm:$0xff]
        %v680 = vld [vmem:[#allocation6 + $0x30] sm:$0xff]
        %v681 = vld [vmem:[#allocation6 + $0x38] sm:$0xff]
        %v682 = vld [vmem:[#allocation6 + $0x40] sm:$0xff]
        %v683 = vld [vmem:[#allocation6 + $0x48] sm:$0xff]
        %v684 = vld [vmem:[#allocation6 + $0x50] sm:$0xff]
        %v685 = vld [vmem:[#allocation6 + $0x58] sm:$0xff]
        %v686 = vld [vmem:[#allocation6 + $0x60] sm:$0xff]
        %v687 = vld [vmem:[#allocation6 + $0x68] sm:$0xff]
        %v688 = vld [vmem:[#allocation6 + $0x70] sm:$0xff]
        %v689 = vld [vmem:[#allocation6 + $0x78] sm:$0xff]
        %v690 = vld [vmem:[#allocation6 + $0x80] sm:$0xff]
        %v691 = vld [vmem:[#allocation6 + $0x88] sm:$0xff]
        %v692 = vld [vmem:[#allocation6 + $0x90] sm:$0xff]
        %v693 = vld [vmem:[#allocation6 + $0x98] sm:$0xff]
        %v694 = vld [vmem:[#allocation6 + $0xa0] sm:$0xff]
        %v695 = vld [vmem:[#allocation6 + $0xa8] sm:$0xff]
        %v696 = vld [vmem:[#allocation6 + $0xb0] sm:$0xff]
        %v697 = vld [vmem:[#allocation6 + $0xb8] sm:$0xff]
        %v698 = vld [vmem:[#allocation6 + $0xc0] sm:$0xff]
        %v699 = vld [vmem:[#allocation6 + $0xc8] sm:$0xff]
        %v700 = vld [vmem:[#allocation6 + $0xd0] sm:$0xff]
        %v701 = vld [vmem:[#allocation6 + $0xd8] sm:$0xff]
        %v702 = vld [vmem:[#allocation6 + $0xe0] sm:$0xff]
        %v703 = vld [vmem:[#allocation6 + $0xe8] sm:$0xff]
        %v704 = vld [vmem:[#allocation6 + $0xf0] sm:$0xff]
        %v705 = vld [vmem:[#allocation6 + $0xf8] sm:$0xff]
        %v706 = vld [vmem:[%s6] sm:$0x3]
        %v708 = vlaneseq
        %v709 = vshrl.u32 %v708, 7
        %v710 = vsub.s32 0, %v709
        %v711 = vrot.slane %v706, %v710
        %v712 = vlaneseq
        %v713 = vshrl.u32 %v712, 7
        %v714 = vsub.s32 1, %v713
        %v715 = vrot.slane %v706, %v714
        %718 = vmatprep.subr.mxu0 %v705
        %719 = vmatpush1.msra.mxu0 %v704
        %720 = vmatprep.subr.mxu0 %v703
        %721 = vmatpush1.msra.mxu0 %v702
        %722 = vmatprep.subr.mxu0 %v701
        %723 = vmatpush1.msra.mxu0 %v700
        %724 = vmatprep.subr.mxu0 %v699
        %725 = vmatpush1.msra.mxu0 %v698
        %726 = vmatprep.subr.mxu0 %v697
        %727 = vmatpush1.msra.mxu0 %v696
        %728 = vmatprep.subr.mxu0 %v695
        %729 = vmatpush1.msra.mxu0 %v694
        %730 = vmatprep.subr.mxu0 %v693
        %731 = vmatpush1.msra.mxu0 %v692
        %732 = vmatprep.subr.mxu0 %v691
        %733 = vmatpush1.msra.mxu0 %v690
        %734 = vmatprep.subr.mxu0 %v689
        %735 = vmatpush1.msra.mxu0 %v688
        %736 = vmatprep.subr.mxu0 %v687
        %737 = vmatpush1.msra.mxu0 %v686
        %738 = vmatprep.subr.mxu0 %v685
        %739 = vmatpush1.msra.mxu0 %v684
        %740 = vmatprep.subr.mxu0 %v683
        %741 = vmatpush1.msra.mxu0 %v682
        %742 = vmatprep.subr.mxu0 %v681
        %743 = vmatpush1.msra.mxu0 %v680
        %744 = vmatprep.subr.mxu0 %v679
        %745 = vmatpush1.msra.mxu0 %v678
        %746 = vmatprep.subr.mxu0 %v677
        %747 = vmatpush1.msra.mxu0 %v676
        %748 = vmatprep.subr.mxu0 %v675
        %749 = vmatpush1.msra.mxu0 %v674
        %750 = vmatprep.subr.mxu0 0.0
        %751 = vmatpush2.msra.mxu0 0.0
        %752 = vmatprep.subr.mxu0 0.0
        %753 = vmatpush2.msra.mxu0 0.0
        %754 = vmatprep.subr.mxu0 0.0
        %755 = vmatpush2.msra.mxu0 0.0
        %756 = vmatprep.subr.mxu0 0.0
        %757 = vmatpush2.msra.mxu0 0.0
        %758 = vmatprep.subr.mxu0 0.0
        %759 = vmatpush2.msra.mxu0 0.0
        %760 = vmatprep.subr.mxu0 0.0
        %761 = vmatpush2.msra.mxu0 0.0
        %762 = vmatprep.subr.mxu0 0.0
        %763 = vmatpush2.msra.mxu0 0.0
        %764 = vmatprep.subr.mxu0 0.0
        %765 = vmatpush2.msra.mxu0 0.0
        %766 = vmatprep.subr.mxu0 0.0
        %767 = vmatpush2.msra.mxu0 0.0
        %768 = vmatprep.subr.mxu0 0.0
        %769 = vmatpush2.msra.mxu0 0.0
        %770 = vmatprep.subr.mxu0 0.0
        %771 = vmatpush2.msra.mxu0 0.0
        %772 = vmatprep.subr.mxu0 0.0
        %773 = vmatpush2.msra.mxu0 0.0
        %774 = vmatprep.subr.mxu0 0.0
        %775 = vmatpush2.msra.mxu0 0.0
        %776 = vmatprep.subr.mxu0 0.0
        %777 = vmatpush2.msra.mxu0 0.0
        %778 = vmatprep.subr.mxu0 0.0
        %779 = vmatpush2.msra.mxu0 0.0
        %780 = vmatprep.subr.mxu0 0.0
        %781 = vmatpush2.msra.mxu0 0.0
        %782 = vmatprep.mubr.f32.mxu0 0.0
        %783 = vmatmul.mubr.f32.gmra.mxu0 %v672
        %v784 = vpop.f32.mrf.mxu0
        %v785 = vadd.f32 %v711, %v784
        %v786 = vpop.f32.mrf.mxu0
        %v787 = vadd.f32 %v715, %v786
        %788 = vmatprep.mubr.f32.mxu0 0.0
        %789 = vmatmul.mubr.f32.gmra.mxu0 %v673
        %v790 = vpop.f32.mrf.mxu0
        %v791 = vadd.f32 %v711, %v790
        %v792 = vpop.f32.mrf.mxu0
        %v793 = vadd.f32 %v715, %v792
        %794 = vdwg.mxu0
        %v795 = vadd.f32 %v409, %v785
        %v796 = vadd.f32 %v410, %v791
        %v797 = vadd.f32 %v787, 0.0
        %v798 = vadd.f32 %v793, 0.0
        %799 = vst [vmem:[#allocation2 + $0x10] sm:$0xff] %v795
        %800 = vst [vmem:[#allocation2 + $0x18] sm:$0xff] %v796
        %v801 = vld [vmem:[#allocation2 + $0x8] sm:$0xff]
        %v802 = vld [vmem:[#allocation2 + $0x10] sm:$0xff]
        %v803 = vld [vmem:[#allocation2 + $0x18] sm:$0xff]
        %v804 = vld [vmem:[#allocation2 + $0x20] sm:$0xff]
        %v807 = vrot.slane %v802, 2
        %v808 = vrot.slane %v803, 2
        %v809 = vsel %vm424, %v807, %v808
        %vm811 = vcmask 1043456
        %v812 = vrot.slane %v802, 4
        %v813 = vrot.slane %v803, 4
        %v814 = vsel %vm811, %v812, %v813
        %v815 = vrot.slane %v804, 4
        %v816 = vsel %vm811, %v813, %v815
        %s817 = scalar_lea.vmem [#allocation3], 384
        %v818 = vld [vmem:[%s817] sm:$0xff]
        %v819 = vld [vmem:[%s817 + $0x8] sm:$0xff]
        %v820 = vld [vmem:[%s817 + $0x10] sm:$0xff]
        %v821 = vld [vmem:[%s817 + $0x18] sm:$0xff]
        %v822 = vld [vmem:[%s817 + $0x20] sm:$0xff]
        %v823 = vld [vmem:[%s817 + $0x28] sm:$0xff]
        %v824 = vld [vmem:[%s817 + $0x30] sm:$0xff]
        %v825 = vld [vmem:[%s817 + $0x38] sm:$0xff]
        %v826 = vld [vmem:[%s817 + $0x40] sm:$0xff]
        %v827 = vld [vmem:[%s817 + $0x48] sm:$0xff]
        %v828 = vld [vmem:[%s817 + $0x50] sm:$0xff]
        %v829 = vld [vmem:[%s817 + $0x58] sm:$0xff]
        %v830 = vld [vmem:[%s817 + $0x60] sm:$0xff]
        %v831 = vld [vmem:[%s817 + $0x68] sm:$0xff]
        %v832 = vld [vmem:[%s817 + $0x70] sm:$0xff]
        %v833 = vld [vmem:[%s817 + $0x78] sm:$0xff]
        %v834 = vld [vmem:[%s817 + $0x80] sm:$0xff]
        %v835 = vld [vmem:[%s817 + $0x88] sm:$0xff]
        %v836 = vld [vmem:[%s817 + $0x90] sm:$0xff]
        %v837 = vld [vmem:[%s817 + $0x98] sm:$0xff]
        %v838 = vld [vmem:[%s817 + $0xa0] sm:$0xff]
        %v839 = vld [vmem:[%s817 + $0xa8] sm:$0xff]
        %v840 = vld [vmem:[%s817 + $0xb0] sm:$0xff]
        %v841 = vld [vmem:[%s817 + $0xb8] sm:$0xff]
        %v842 = vld [vmem:[%s817 + $0xc0] sm:$0xff]
        %v843 = vld [vmem:[%s817 + $0xc8] sm:$0xff]
        %v844 = vld [vmem:[%s817 + $0xd0] sm:$0xff]
        %v845 = vld [vmem:[%s817 + $0xd8] sm:$0xff]
        %v846 = vld [vmem:[%s817 + $0xe0] sm:$0xff]
        %v847 = vld [vmem:[%s817 + $0xe8] sm:$0xff]
        %v848 = vld [vmem:[%s817 + $0xf0] sm:$0xff]
        %v849 = vld [vmem:[%s817 + $0xf8] sm:$0xff]
        %v850 = vld [vmem:[%s817 + $0x100] sm:$0xff]
        %v851 = vld [vmem:[%s817 + $0x108] sm:$0xff]
        %v852 = vld [vmem:[%s817 + $0x110] sm:$0xff]
        %v853 = vld [vmem:[%s817 + $0x118] sm:$0xff]
        %v854 = vld [vmem:[%s817 + $0x120] sm:$0xff]
        %v855 = vld [vmem:[%s817 + $0x128] sm:$0xff]
        %v856 = vld [vmem:[%s817 + $0x130] sm:$0xff]
        %v857 = vld [vmem:[%s817 + $0x138] sm:$0xff]
        %v858 = vld [vmem:[%s817 + $0x140] sm:$0xff]
        %v859 = vld [vmem:[%s817 + $0x148] sm:$0xff]
        %v860 = vld [vmem:[%s817 + $0x150] sm:$0xff]
        %v861 = vld [vmem:[%s817 + $0x158] sm:$0xff]
        %v862 = vld [vmem:[%s817 + $0x160] sm:$0xff]
        %v863 = vld [vmem:[%s817 + $0x168] sm:$0xff]
        %v864 = vld [vmem:[%s817 + $0x170] sm:$0xff]
        %v865 = vld [vmem:[%s817 + $0x178] sm:$0xff]
        %s866 = scalar_lea.vmem %s4, 1
        %v867 = vld [vmem:[%s866] sm:$0x1]
        %v869 = vlaneseq
        %v870 = vshrl.u32 %v869, 7
        %v871 = vsub.s32 0, %v870
        %v872 = vrot.slane %v867, %v871
        %vm875 = vcmask 1041408
        %v876 = vrot.slane %v801, 6
        %v877 = vrot.slane %v802, 6
        %v878 = vsel %vm875, %v876, %v877
        %v879 = vrot.slane %v807, 6
        %v880 = vrot.slane %v809, 6
        %v881 = vsel %vm875, %v879, %v880
        %v882 = vrot.slane %v812, 6
        %v883 = vrot.slane %v814, 6
        %v884 = vsel %vm875, %v882, %v883
        %v885 = vrot.slane %v803, 6
        %v886 = vsel %vm875, %v877, %v885
        %v887 = vrot.slane %v808, 6
        %v888 = vsel %vm875, %v880, %v887
        %v889 = vrot.slane %v816, 6
        %v890 = vsel %vm875, %v883, %v889
        %897 = vmatprep.subr.mxu0 0.0
        %898 = vmatpush1.msra.mxu0 %v833
        %899 = vmatprep.subr.mxu0 0.0
        %900 = vmatpush1.msra.mxu0 %v832
        %901 = vmatprep.subr.mxu0 0.0
        %902 = vmatpush1.msra.mxu0 %v831
        %903 = vmatprep.subr.mxu0 0.0
        %904 = vmatpush1.msra.mxu0 %v830
        %905 = vmatprep.subr.mxu0 0.0
        %906 = vmatpush1.msra.mxu0 %v829
        %907 = vmatprep.subr.mxu0 0.0
        %908 = vmatpush1.msra.mxu0 %v828
        %909 = vmatprep.subr.mxu0 0.0
        %910 = vmatpush1.msra.mxu0 %v827
        %911 = vmatprep.subr.mxu0 0.0
        %912 = vmatpush1.msra.mxu0 %v826
        %913 = vmatprep.subr.mxu0 0.0
        %914 = vmatpush1.msra.mxu0 %v825
        %915 = vmatprep.subr.mxu0 0.0
        %916 = vmatpush1.msra.mxu0 %v824
        %917 = vmatprep.subr.mxu0 0.0
        %918 = vmatpush1.msra.mxu0 %v823
        %919 = vmatprep.subr.mxu0 0.0
        %920 = vmatpush1.msra.mxu0 %v822
        %921 = vmatprep.subr.mxu0 0.0
        %922 = vmatpush1.msra.mxu0 %v821
        %923 = vmatprep.subr.mxu0 0.0
        %924 = vmatpush1.msra.mxu0 %v820
        %925 = vmatprep.subr.mxu0 0.0
        %926 = vmatpush1.msra.mxu0 %v819
        %927 = vmatprep.subr.mxu0 0.0
        %928 = vmatpush1.msra.mxu0 %v818
        %929 = vmatprep.subr.mxu0 0.0
        %930 = vmatpush2.msra.mxu0 %v849
        %931 = vmatprep.subr.mxu0 0.0
        %932 = vmatpush2.msra.mxu0 %v848
        %933 = vmatprep.subr.mxu0 0.0
        %934 = vmatpush2.msra.mxu0 %v847
        %935 = vmatprep.subr.mxu0 0.0
        %936 = vmatpush2.msra.mxu0 %v846
        %937 = vmatprep.subr.mxu0 0.0
        %938 = vmatpush2.msra.mxu0 %v845
        %939 = vmatprep.subr.mxu0 0.0
        %940 = vmatpush2.msra.mxu0 %v844
        %941 = vmatprep.subr.mxu0 0.0
        %942 = vmatpush2.msra.mxu0 %v843
        %943 = vmatprep.subr.mxu0 0.0
        %944 = vmatpush2.msra.mxu0 %v842
        %945 = vmatprep.subr.mxu0 0.0
        %946 = vmatpush2.msra.mxu0 %v841
        %947 = vmatprep.subr.mxu0 0.0
        %948 = vmatpush2.msra.mxu0 %v840
        %949 = vmatprep.subr.mxu0 0.0
        %950 = vmatpush2.msra.mxu0 %v839
        %951 = vmatprep.subr.mxu0 0.0
        %952 = vmatpush2.msra.mxu0 %v838
        %953 = vmatprep.subr.mxu0 0.0
        %954 = vmatpush2.msra.mxu0 %v837
        %955 = vmatprep.subr.mxu0 0.0
        %956 = vmatpush2.msra.mxu0 %v836
        %957 = vmatprep.subr.mxu0 0.0
        %958 = vmatpush2.msra.mxu0 %v835
        %959 = vmatprep.subr.mxu0 0.0
        %960 = vmatpush2.msra.mxu0 %v834
        %961 = vmatprep.mubr.f32.mxu0 %v881
        %962 = vmatmul.mubr.f32.gmra.mxu0 %v878
        %v963 = vpop.f32.mrf.mxu0
        %v964 = vadd.f32 %v872, %v963
        %v965 = vpop.f32.mrf.mxu0
        %966 = vmatprep.mubr.f32.mxu0 %v888
        %967 = vmatmul.mubr.f32.gmra.mxu0 %v886
        %v968 = vpop.f32.mrf.mxu0
        %v969 = vadd.f32 %v872, %v968
        %v970 = vpop.f32.mrf.mxu0
        %971 = vdwg.mxu0
        %972 = vmatprep.subr.mxu0 0.0
        %973 = vmatpush1.msra.mxu0 %v865
        %974 = vmatprep.subr.mxu0 0.0
        %975 = vmatpush1.msra.mxu0 %v864
        %976 = vmatprep.subr.mxu0 0.0
        %977 = vmatpush1.msra.mxu0 %v863
        %978 = vmatprep.subr.mxu0 0.0
        %979 = vmatpush1.msra.mxu0 %v862
        %980 = vmatprep.subr.mxu0 0.0
        %981 = vmatpush1.msra.mxu0 %v861
        %982 = vmatprep.subr.mxu0 0.0
        %983 = vmatpush1.msra.mxu0 %v860
        %984 = vmatprep.subr.mxu0 0.0
        %985 = vmatpush1.msra.mxu0 %v859
        %986 = vmatprep.subr.mxu0 0.0
        %987 = vmatpush1.msra.mxu0 %v858
        %988 = vmatprep.subr.mxu0 0.0
        %989 = vmatpush1.msra.mxu0 %v857
        %990 = vmatprep.subr.mxu0 0.0
        %991 = vmatpush1.msra.mxu0 %v856
        %992 = vmatprep.subr.mxu0 0.0
        %993 = vmatpush1.msra.mxu0 %v855
        %994 = vmatprep.subr.mxu0 0.0
        %995 = vmatpush1.msra.mxu0 %v854
        %996 = vmatprep.subr.mxu0 0.0
        %997 = vmatpush1.msra.mxu0 %v853
        %998 = vmatprep.subr.mxu0 0.0
        %999 = vmatpush1.msra.mxu0 %v852
        %1000 = vmatprep.subr.mxu0 0.0
        %1001 = vmatpush1.msra.mxu0 %v851
        %1002 = vmatprep.subr.mxu0 0.0
        %1003 = vmatpush1.msra.mxu0 %v850
        %1004 = vmatprep.subr.mxu0 0.0
        %1005 = vmatpush2.msra.mxu0 0.0
        %1006 = vmatprep.subr.mxu0 0.0
        %1007 = vmatpush2.msra.mxu0 0.0
        %1008 = vmatprep.subr.mxu0 0.0
        %1009 = vmatpush2.msra.mxu0 0.0
        %1010 = vmatprep.subr.mxu0 0.0
        %1011 = vmatpush2.msra.mxu0 0.0
        %1012 = vmatprep.subr.mxu0 0.0
        %1013 = vmatpush2.msra.mxu0 0.0
        %1014 = vmatprep.subr.mxu0 0.0
        %1015 = vmatpush2.msra.mxu0 0.0
        %1016 = vmatprep.subr.mxu0 0.0
        %1017 = vmatpush2.msra.mxu0 0.0
        %1018 = vmatprep.subr.mxu0 0.0
        %1019 = vmatpush2.msra.mxu0 0.0
        %1020 = vmatprep.subr.mxu0 0.0
        %1021 = vmatpush2.msra.mxu0 0.0
        %1022 = vmatprep.subr.mxu0 0.0
        %1023 = vmatpush2.msra.mxu0 0.0
        %1024 = vmatprep.subr.mxu0 0.0
        %1025 = vmatpush2.msra.mxu0 0.0
        %1026 = vmatprep.subr.mxu0 0.0
        %1027 = vmatpush2.msra.mxu0 0.0
        %1028 = vmatprep.subr.mxu0 0.0
        %1029 = vmatpush2.msra.mxu0 0.0
        %1030 = vmatprep.subr.mxu0 0.0
        %1031 = vmatpush2.msra.mxu0 0.0
        %1032 = vmatprep.subr.mxu0 0.0
        %1033 = vmatpush2.msra.mxu0 0.0
        %1034 = vmatprep.subr.mxu0 0.0
        %1035 = vmatpush2.msra.mxu0 0.0
        %1036 = vmatprep.mubr.f32.mxu0 0.0
        %1037 = vmatmul.mubr.f32.gmra.mxu0 %v884
        %v1038 = vpop.f32.mrf.mxu0
        %v1039 = vadd.f32 %v964, %v1038
        %v1040 = vpop.f32.mrf.mxu0
        %1041 = vmatprep.mubr.f32.mxu0 0.0
        %1042 = vmatmul.mubr.f32.gmra.mxu0 %v890
        %v1043 = vpop.f32.mrf.mxu0
        %v1044 = vadd.f32 %v969, %v1043
        %v1045 = vpop.f32.mrf.mxu0
        %1046 = vdwg.mxu0
        %v1047 = vtanh.pop %v1039
        %v1048 = vtanh.pop %v1044
        %v1049 = vxor.u32 %v1039, 2147483648
        %v1050 = vxor.u32 %v1044, 2147483648
        %v1051 = vmul.f32 %v1049, 1.442695
        %v1052 = vpow.pop %v1051
        %v1053 = vmul.f32 %v1050, 1.442695
        %v1054 = vpow.pop %v1053
        %v1055 = vadd.f32 %v1052, 1.0
        %v1056 = vadd.f32 %v1054, 1.0
        %v1057 = vrcp.pop %v1055
        %v1058 = vmul.f32 1.0, %v1057
        %v1059 = vrcp.pop %v1056
        %v1060 = vmul.f32 1.0, %v1059
        %v1061 = vmul.f32 %v1047, %v1058
        %v1062 = vmul.f32 %v1048, %v1060
        %s1063 = scalar_lea.vmem [#allocation6], 256
        %v1064 = vld [vmem:[%s1063] sm:$0xff]
        %v1065 = vld [vmem:[%s1063 + $0x8] sm:$0xff]
        %v1066 = vld [vmem:[%s1063 + $0x10] sm:$0xff]
        %v1067 = vld [vmem:[%s1063 + $0x18] sm:$0xff]
        %v1068 = vld [vmem:[%s1063 + $0x20] sm:$0xff]
        %v1069 = vld [vmem:[%s1063 + $0x28] sm:$0xff]
        %v1070 = vld [vmem:[%s1063 + $0x30] sm:$0xff]
        %v1071 = vld [vmem:[%s1063 + $0x38] sm:$0xff]
        %v1072 = vld [vmem:[%s1063 + $0x40] sm:$0xff]
        %v1073 = vld [vmem:[%s1063 + $0x48] sm:$0xff]
        %v1074 = vld [vmem:[%s1063 + $0x50] sm:$0xff]
        %v1075 = vld [vmem:[%s1063 + $0x58] sm:$0xff]
        %v1076 = vld [vmem:[%s1063 + $0x60] sm:$0xff]
        %v1077 = vld [vmem:[%s1063 + $0x68] sm:$0xff]
        %v1078 = vld [vmem:[%s1063 + $0x70] sm:$0xff]
        %v1079 = vld [vmem:[%s1063 + $0x78] sm:$0xff]
        %v1080 = vld [vmem:[%s1063 + $0x80] sm:$0xff]
        %v1081 = vld [vmem:[%s1063 + $0x88] sm:$0xff]
        %v1082 = vld [vmem:[%s1063 + $0x90] sm:$0xff]
        %v1083 = vld [vmem:[%s1063 + $0x98] sm:$0xff]
        %v1084 = vld [vmem:[%s1063 + $0xa0] sm:$0xff]
        %v1085 = vld [vmem:[%s1063 + $0xa8] sm:$0xff]
        %v1086 = vld [vmem:[%s1063 + $0xb0] sm:$0xff]
        %v1087 = vld [vmem:[%s1063 + $0xb8] sm:$0xff]
        %v1088 = vld [vmem:[%s1063 + $0xc0] sm:$0xff]
        %v1089 = vld [vmem:[%s1063 + $0xc8] sm:$0xff]
        %v1090 = vld [vmem:[%s1063 + $0xd0] sm:$0xff]
        %v1091 = vld [vmem:[%s1063 + $0xd8] sm:$0xff]
        %v1092 = vld [vmem:[%s1063 + $0xe0] sm:$0xff]
        %v1093 = vld [vmem:[%s1063 + $0xe8] sm:$0xff]
        %v1094 = vld [vmem:[%s1063 + $0xf0] sm:$0xff]
        %v1095 = vld [vmem:[%s1063 + $0xf8] sm:$0xff]
        %s1096 = scalar_lea.vmem %s6, 2
        %v1097 = vld [vmem:[%s1096] sm:$0x3]
        %v1099 = vlaneseq
        %v1100 = vshrl.u32 %v1099, 7
        %v1101 = vsub.s32 0, %v1100
        %v1102 = vrot.slane %v1097, %v1101
        %v1103 = vlaneseq
        %v1104 = vshrl.u32 %v1103, 7
        %v1105 = vsub.s32 1, %v1104
        %v1106 = vrot.slane %v1097, %v1105
        %1109 = vmatprep.subr.mxu0 %v1095
        %1110 = vmatpush1.msra.mxu0 %v1094
        %1111 = vmatprep.subr.mxu0 %v1093
        %1112 = vmatpush1.msra.mxu0 %v1092
        %1113 = vmatprep.subr.mxu0 %v1091
        %1114 = vmatpush1.msra.mxu0 %v1090
        %1115 = vmatprep.subr.mxu0 %v1089
        %1116 = vmatpush1.msra.mxu0 %v1088
        %1117 = vmatprep.subr.mxu0 %v1087
        %1118 = vmatpush1.msra.mxu0 %v1086
        %1119 = vmatprep.subr.mxu0 %v1085
        %1120 = vmatpush1.msra.mxu0 %v1084
        %1121 = vmatprep.subr.mxu0 %v1083
        %1122 = vmatpush1.msra.mxu0 %v1082
        %1123 = vmatprep.subr.mxu0 %v1081
        %1124 = vmatpush1.msra.mxu0 %v1080
        %1125 = vmatprep.subr.mxu0 %v1079
        %1126 = vmatpush1.msra.mxu0 %v1078
        %1127 = vmatprep.subr.mxu0 %v1077
        %1128 = vmatpush1.msra.mxu0 %v1076
        %1129 = vmatprep.subr.mxu0 %v1075
        %1130 = vmatpush1.msra.mxu0 %v1074
        %1131 = vmatprep.subr.mxu0 %v1073
        %1132 = vmatpush1.msra.mxu0 %v1072
        %1133 = vmatprep.subr.mxu0 %v1071
        %1134 = vmatpush1.msra.mxu0 %v1070
        %1135 = vmatprep.subr.mxu0 %v1069
        %1136 = vmatpush1.msra.mxu0 %v1068
        %1137 = vmatprep.subr.mxu0 %v1067
        %1138 = vmatpush1.msra.mxu0 %v1066
        %1139 = vmatprep.subr.mxu0 %v1065
        %1140 = vmatpush1.msra.mxu0 %v1064
        %1141 = vmatprep.subr.mxu0 0.0
        %1142 = vmatpush2.msra.mxu0 0.0
        %1143 = vmatprep.subr.mxu0 0.0
        %1144 = vmatpush2.msra.mxu0 0.0
        %1145 = vmatprep.subr.mxu0 0.0
        %1146 = vmatpush2.msra.mxu0 0.0
        %1147 = vmatprep.subr.mxu0 0.0
        %1148 = vmatpush2.msra.mxu0 0.0
        %1149 = vmatprep.subr.mxu0 0.0
        %1150 = vmatpush2.msra.mxu0 0.0
        %1151 = vmatprep.subr.mxu0 0.0
        %1152 = vmatpush2.msra.mxu0 0.0
        %1153 = vmatprep.subr.mxu0 0.0
        %1154 = vmatpush2.msra.mxu0 0.0
        %1155 = vmatprep.subr.mxu0 0.0
        %1156 = vmatpush2.msra.mxu0 0.0
        %1157 = vmatprep.subr.mxu0 0.0
        %1158 = vmatpush2.msra.mxu0 0.0
        %1159 = vmatprep.subr.mxu0 0.0
        %1160 = vmatpush2.msra.mxu0 0.0
        %1161 = vmatprep.subr.mxu0 0.0
        %1162 = vmatpush2.msra.mxu0 0.0
        %1163 = vmatprep.subr.mxu0 0.0
        %1164 = vmatpush2.msra.mxu0 0.0
        %1165 = vmatprep.subr.mxu0 0.0
        %1166 = vmatpush2.msra.mxu0 0.0
        %1167 = vmatprep.subr.mxu0 0.0
        %1168 = vmatpush2.msra.mxu0 0.0
        %1169 = vmatprep.subr.mxu0 0.0
        %1170 = vmatpush2.msra.mxu0 0.0
        %1171 = vmatprep.subr.mxu0 0.0
        %1172 = vmatpush2.msra.mxu0 0.0
        %1173 = vmatprep.mubr.f32.mxu0 0.0
        %1174 = vmatmul.mubr.f32.gmra.mxu0 %v1061
        %v1175 = vpop.f32.mrf.mxu0
        %v1176 = vadd.f32 %v1102, %v1175
        %v1177 = vpop.f32.mrf.mxu0
        %v1178 = vadd.f32 %v1106, %v1177
        %1179 = vmatprep.mubr.f32.mxu0 0.0
        %1180 = vmatmul.mubr.f32.gmra.mxu0 %v1062
        %v1181 = vpop.f32.mrf.mxu0
        %v1182 = vadd.f32 %v1102, %v1181
        %v1183 = vpop.f32.mrf.mxu0
        %v1184 = vadd.f32 %v1106, %v1183
        %1185 = vdwg.mxu0
        %v1186 = vadd.f32 %v795, %v1176
        %v1187 = vadd.f32 %v796, %v1182
        %v1188 = vadd.f32 %v797, %v1178
        %v1189 = vadd.f32 %v798, %v1184
        %1190 = vst [vmem:[#allocation2 + $0x10] sm:$0xff] %v1186
        %1191 = vst [vmem:[#allocation2 + $0x18] sm:$0xff] %v1187
        %v1192 = vld [vmem:[#allocation2 + $0x8] sm:$0xff]
        %v1193 = vld [vmem:[#allocation2 + $0x10] sm:$0xff]
        %v1194 = vld [vmem:[#allocation2 + $0x18] sm:$0xff]
        %v1195 = vld [vmem:[#allocation2 + $0x20] sm:$0xff]
        %v1198 = vrot.slane %v1193, 4
        %v1199 = vrot.slane %v1194, 4
        %v1200 = vsel %vm811, %v1198, %v1199
        %s1201 = scalar_lea.vmem [#allocation3], 768
        %v1202 = vld [vmem:[%s1201] sm:$0xff]
        %v1203 = vld [vmem:[%s1201 + $0x8] sm:$0xff]
        %v1204 = vld [vmem:[%s1201 + $0x10] sm:$0xff]
        %v1205 = vld [vmem:[%s1201 + $0x18] sm:$0xff]
        %v1206 = vld [vmem:[%s1201 + $0x20] sm:$0xff]
        %v1207 = vld [vmem:[%s1201 + $0x28] sm:$0xff]
        %v1208 = vld [vmem:[%s1201 + $0x30] sm:$0xff]
        %v1209 = vld [vmem:[%s1201 + $0x38] sm:$0xff]
        %v1210 = vld [vmem:[%s1201 + $0x40] sm:$0xff]
        %v1211 = vld [vmem:[%s1201 + $0x48] sm:$0xff]
        %v1212 = vld [vmem:[%s1201 + $0x50] sm:$0xff]
        %v1213 = vld [vmem:[%s1201 + $0x58] sm:$0xff]
        %v1214 = vld [vmem:[%s1201 + $0x60] sm:$0xff]
        %v1215 = vld [vmem:[%s1201 + $0x68] sm:$0xff]
        %v1216 = vld [vmem:[%s1201 + $0x70] sm:$0xff]
        %v1217 = vld [vmem:[%s1201 + $0x78] sm:$0xff]
        %v1218 = vld [vmem:[%s1201 + $0x80] sm:$0xff]
        %v1219 = vld [vmem:[%s1201 + $0x88] sm:$0xff]
        %v1220 = vld [vmem:[%s1201 + $0x90] sm:$0xff]
        %v1221 = vld [vmem:[%s1201 + $0x98] sm:$0xff]
        %v1222 = vld [vmem:[%s1201 + $0xa0] sm:$0xff]
        %v1223 = vld [vmem:[%s1201 + $0xa8] sm:$0xff]
        %v1224 = vld [vmem:[%s1201 + $0xb0] sm:$0xff]
        %v1225 = vld [vmem:[%s1201 + $0xb8] sm:$0xff]
        %v1226 = vld [vmem:[%s1201 + $0xc0] sm:$0xff]
        %v1227 = vld [vmem:[%s1201 + $0xc8] sm:$0xff]
        %v1228 = vld [vmem:[%s1201 + $0xd0] sm:$0xff]
        %v1229 = vld [vmem:[%s1201 + $0xd8] sm:$0xff]
        %v1230 = vld [vmem:[%s1201 + $0xe0] sm:$0xff]
        %v1231 = vld [vmem:[%s1201 + $0xe8] sm:$0xff]
        %v1232 = vld [vmem:[%s1201 + $0xf0] sm:$0xff]
        %v1233 = vld [vmem:[%s1201 + $0xf8] sm:$0xff]
        %v1234 = vld [vmem:[%s1201 + $0x100] sm:$0xff]
        %v1235 = vld [vmem:[%s1201 + $0x108] sm:$0xff]
        %v1236 = vld [vmem:[%s1201 + $0x110] sm:$0xff]
        %v1237 = vld [vmem:[%s1201 + $0x118] sm:$0xff]
        %v1238 = vld [vmem:[%s1201 + $0x120] sm:$0xff]
        %v1239 = vld [vmem:[%s1201 + $0x128] sm:$0xff]
        %v1240 = vld [vmem:[%s1201 + $0x130] sm:$0xff]
        %v1241 = vld [vmem:[%s1201 + $0x138] sm:$0xff]
        %v1242 = vld [vmem:[%s1201 + $0x140] sm:$0xff]
        %v1243 = vld [vmem:[%s1201 + $0x148] sm:$0xff]
        %v1244 = vld [vmem:[%s1201 + $0x150] sm:$0xff]
        %v1245 = vld [vmem:[%s1201 + $0x158] sm:$0xff]
        %v1246 = vld [vmem:[%s1201 + $0x160] sm:$0xff]
        %v1247 = vld [vmem:[%s1201 + $0x168] sm:$0xff]
        %v1248 = vld [vmem:[%s1201 + $0x170] sm:$0xff]
        %v1249 = vld [vmem:[%s1201 + $0x178] sm:$0xff]
        %s1250 = scalar_lea.vmem %s4, 2
        %v1251 = vld [vmem:[%s1250] sm:$0x1]
        %v1253 = vlaneseq
        %v1254 = vshrl.u32 %v1253, 7
        %v1255 = vsub.s32 0, %v1254
        %v1256 = vrot.slane %v1251, %v1255
        %v1260 = vrot.slane %v1192, 4
        %v1261 = vsel %vm811, %v1260, %v1198
        %v1262 = vrot.slane %v1198, 4
        %v1263 = vrot.slane %v1200, 4
        %v1264 = vsel %vm811, %v1262, %v1263
        %v1265 = vrot.slane %v1199, 4
        %v1266 = vsel %vm811, %v1263, %v1265
        %v1267 = vrot.slane %v1195, 4
        %v1268 = vsel %vm811, %v1199, %v1267
        %1274 = vmatprep.subr.mxu0 0.0
        %1275 = vmatpush1.msra.mxu0 %v1217
        %1276 = vmatprep.subr.mxu0 0.0
        %1277 = vmatpush1.msra.mxu0 %v1216
        %1278 = vmatprep.subr.mxu0 0.0
        %1279 = vmatpush1.msra.mxu0 %v1215
        %1280 = vmatprep.subr.mxu0 0.0
        %1281 = vmatpush1.msra.mxu0 %v1214
        %1282 = vmatprep.subr.mxu0 0.0
        %1283 = vmatpush1.msra.mxu0 %v1213
        %1284 = vmatprep.subr.mxu0 0.0
        %1285 = vmatpush1.msra.mxu0 %v1212
        %1286 = vmatprep.subr.mxu0 0.0
        %1287 = vmatpush1.msra.mxu0 %v1211
        %1288 = vmatprep.subr.mxu0 0.0
        %1289 = vmatpush1.msra.mxu0 %v1210
        %1290 = vmatprep.subr.mxu0 0.0
        %1291 = vmatpush1.msra.mxu0 %v1209
        %1292 = vmatprep.subr.mxu0 0.0
        %1293 = vmatpush1.msra.mxu0 %v1208
        %1294 = vmatprep.subr.mxu0 0.0
        %1295 = vmatpush1.msra.mxu0 %v1207
        %1296 = vmatprep.subr.mxu0 0.0
        %1297 = vmatpush1.msra.mxu0 %v1206
        %1298 = vmatprep.subr.mxu0 0.0
        %1299 = vmatpush1.msra.mxu0 %v1205
        %1300 = vmatprep.subr.mxu0 0.0
        %1301 = vmatpush1.msra.mxu0 %v1204
        %1302 = vmatprep.subr.mxu0 0.0
        %1303 = vmatpush1.msra.mxu0 %v1203
        %1304 = vmatprep.subr.mxu0 0.0
        %1305 = vmatpush1.msra.mxu0 %v1202
        %1306 = vmatprep.subr.mxu0 0.0
        %1307 = vmatpush2.msra.mxu0 %v1233
        %1308 = vmatprep.subr.mxu0 0.0
        %1309 = vmatpush2.msra.mxu0 %v1232
        %1310 = vmatprep.subr.mxu0 0.0
        %1311 = vmatpush2.msra.mxu0 %v1231
        %1312 = vmatprep.subr.mxu0 0.0
        %1313 = vmatpush2.msra.mxu0 %v1230
        %1314 = vmatprep.subr.mxu0 0.0
        %1315 = vmatpush2.msra.mxu0 %v1229
        %1316 = vmatprep.subr.mxu0 0.0
        %1317 = vmatpush2.msra.mxu0 %v1228
        %1318 = vmatprep.subr.mxu0 0.0
        %1319 = vmatpush2.msra.mxu0 %v1227
        %1320 = vmatprep.subr.mxu0 0.0
        %1321 = vmatpush2.msra.mxu0 %v1226
        %1322 = vmatprep.subr.mxu0 0.0
        %1323 = vmatpush2.msra.mxu0 %v1225
        %1324 = vmatprep.subr.mxu0 0.0
        %1325 = vmatpush2.msra.mxu0 %v1224
        %1326 = vmatprep.subr.mxu0 0.0
        %1327 = vmatpush2.msra.mxu0 %v1223
        %1328 = vmatprep.subr.mxu0 0.0
        %1329 = vmatpush2.msra.mxu0 %v1222
        %1330 = vmatprep.subr.mxu0 0.0
        %1331 = vmatpush2.msra.mxu0 %v1221
        %1332 = vmatprep.subr.mxu0 0.0
        %1333 = vmatpush2.msra.mxu0 %v1220
        %1334 = vmatprep.subr.mxu0 0.0
        %1335 = vmatpush2.msra.mxu0 %v1219
        %1336 = vmatprep.subr.mxu0 0.0
        %1337 = vmatpush2.msra.mxu0 %v1218
        %1338 = vmatprep.mubr.f32.mxu0 %v1264
        %1339 = vmatmul.mubr.f32.gmra.mxu0 %v1261
        %v1340 = vpop.f32.mrf.mxu0
        %v1341 = vadd.f32 %v1256, %v1340
        %v1342 = vpop.f32.mrf.mxu0
        %1343 = vmatprep.mubr.f32.mxu0 %v1266
        %1344 = vmatmul.mubr.f32.gmra.mxu0 %v1200
        %v1345 = vpop.f32.mrf.mxu0
        %v1346 = vadd.f32 %v1256, %v1345
        %v1347 = vpop.f32.mrf.mxu0
        %1348 = vdwg.mxu0
        %1349 = vmatprep.subr.mxu0 0.0
        %1350 = vmatpush1.msra.mxu0 %v1249
        %1351 = vmatprep.subr.mxu0 0.0
        %1352 = vmatpush1.msra.mxu0 %v1248
        %1353 = vmatprep.subr.mxu0 0.0
        %1354 = vmatpush1.msra.mxu0 %v1247
        %1355 = vmatprep.subr.mxu0 0.0
        %1356 = vmatpush1.msra.mxu0 %v1246
        %1357 = vmatprep.subr.mxu0 0.0
        %1358 = vmatpush1.msra.mxu0 %v1245
        %1359 = vmatprep.subr.mxu0 0.0
        %1360 = vmatpush1.msra.mxu0 %v1244
        %1361 = vmatprep.subr.mxu0 0.0
        %1362 = vmatpush1.msra.mxu0 %v1243
        %1363 = vmatprep.subr.mxu0 0.0
        %1364 = vmatpush1.msra.mxu0 %v1242
        %1365 = vmatprep.subr.mxu0 0.0
        %1366 = vmatpush1.msra.mxu0 %v1241
        %1367 = vmatprep.subr.mxu0 0.0
        %1368 = vmatpush1.msra.mxu0 %v1240
        %1369 = vmatprep.subr.mxu0 0.0
        %1370 = vmatpush1.msra.mxu0 %v1239
        %1371 = vmatprep.subr.mxu0 0.0
        %1372 = vmatpush1.msra.mxu0 %v1238
        %1373 = vmatprep.subr.mxu0 0.0
        %1374 = vmatpush1.msra.mxu0 %v1237
        %1375 = vmatprep.subr.mxu0 0.0
        %1376 = vmatpush1.msra.mxu0 %v1236
        %1377 = vmatprep.subr.mxu0 0.0
        %1378 = vmatpush1.msra.mxu0 %v1235
        %1379 = vmatprep.subr.mxu0 0.0
        %1380 = vmatpush1.msra.mxu0 %v1234
        %1381 = vmatprep.subr.mxu0 0.0
        %1382 = vmatpush2.msra.mxu0 0.0
        %1383 = vmatprep.subr.mxu0 0.0
        %1384 = vmatpush2.msra.mxu0 0.0
        %1385 = vmatprep.subr.mxu0 0.0
        %1386 = vmatpush2.msra.mxu0 0.0
        %1387 = vmatprep.subr.mxu0 0.0
        %1388 = vmatpush2.msra.mxu0 0.0
        %1389 = vmatprep.subr.mxu0 0.0
        %1390 = vmatpush2.msra.mxu0 0.0
        %1391 = vmatprep.subr.mxu0 0.0
        %1392 = vmatpush2.msra.mxu0 0.0
        %1393 = vmatprep.subr.mxu0 0.0
        %1394 = vmatpush2.msra.mxu0 0.0
        %1395 = vmatprep.subr.mxu0 0.0
        %1396 = vmatpush2.msra.mxu0 0.0
        %1397 = vmatprep.subr.mxu0 0.0
        %1398 = vmatpush2.msra.mxu0 0.0
        %1399 = vmatprep.subr.mxu0 0.0
        %1400 = vmatpush2.msra.mxu0 0.0
        %1401 = vmatprep.subr.mxu0 0.0
        %1402 = vmatpush2.msra.mxu0 0.0
        %1403 = vmatprep.subr.mxu0 0.0
        %1404 = vmatpush2.msra.mxu0 0.0
        %1405 = vmatprep.subr.mxu0 0.0
        %1406 = vmatpush2.msra.mxu0 0.0
        %1407 = vmatprep.subr.mxu0 0.0
        %1408 = vmatpush2.msra.mxu0 0.0
        %1409 = vmatprep.subr.mxu0 0.0
        %1410 = vmatpush2.msra.mxu0 0.0
        %1411 = vmatprep.subr.mxu0 0.0
        %1412 = vmatpush2.msra.mxu0 0.0
        %1413 = vmatprep.mubr.f32.mxu0 0.0
        %1414 = vmatmul.mubr.f32.gmra.mxu0 %v1200
        %v1415 = vpop.f32.mrf.mxu0
        %v1416 = vadd.f32 %v1341, %v1415
        %v1417 = vpop.f32.mrf.mxu0
        %1418 = vmatprep.mubr.f32.mxu0 0.0
        %1419 = vmatmul.mubr.f32.gmra.mxu0 %v1268
        %v1420 = vpop.f32.mrf.mxu0
        %v1421 = vadd.f32 %v1346, %v1420
        %v1422 = vpop.f32.mrf.mxu0
        %1423 = vdwg.mxu0
        %v1424 = vtanh.pop %v1416
        %v1425 = vtanh.pop %v1421
        %v1426 = vxor.u32 %v1416, 2147483648
        %v1427 = vxor.u32 %v1421, 2147483648
        %v1428 = vmul.f32 %v1426, 1.442695
        %v1429 = vpow.pop %v1428
        %v1430 = vmul.f32 %v1427, 1.442695
        %v1431 = vpow.pop %v1430
        %v1432 = vadd.f32 %v1429, 1.0
        %v1433 = vadd.f32 %v1431, 1.0
        %v1434 = vrcp.pop %v1432
        %v1435 = vmul.f32 1.0, %v1434
        %v1436 = vrcp.pop %v1433
        %v1437 = vmul.f32 1.0, %v1436
        %v1438 = vmul.f32 %v1424, %v1435
        %v1439 = vmul.f32 %v1425, %v1437
        %s1440 = scalar_lea.vmem [#allocation6], 512
        %v1441 = vld [vmem:[%s1440] sm:$0xff]
        %v1442 = vld [vmem:[%s1440 + $0x8] sm:$0xff]
        %v1443 = vld [vmem:[%s1440 + $0x10] sm:$0xff]
        %v1444 = vld [vmem:[%s1440 + $0x18] sm:$0xff]
        %v1445 = vld [vmem:[%s1440 + $0x20] sm:$0xff]
        %v1446 = vld [vmem:[%s1440 + $0x28] sm:$0xff]
        %v1447 = vld [vmem:[%s1440 + $0x30] sm:$0xff]
        %v1448 = vld [vmem:[%s1440 + $0x38] sm:$0xff]
        %v1449 = vld [vmem:[%s1440 + $0x40] sm:$0xff]
        %v1450 = vld [vmem:[%s1440 + $0x48] sm:$0xff]
        %v1451 = vld [vmem:[%s1440 + $0x50] sm:$0xff]
        %v1452 = vld [vmem:[%s1440 + $0x58] sm:$0xff]
        %v1453 = vld [vmem:[%s1440 + $0x60] sm:$0xff]
        %v1454 = vld [vmem:[%s1440 + $0x68] sm:$0xff]
        %v1455 = vld [vmem:[%s1440 + $0x70] sm:$0xff]
        %v1456 = vld [vmem:[%s1440 + $0x78] sm:$0xff]
        %v1457 = vld [vmem:[%s1440 + $0x80] sm:$0xff]
        %v1458 = vld [vmem:[%s1440 + $0x88] sm:$0xff]
        %v1459 = vld [vmem:[%s1440 + $0x90] sm:$0xff]
        %v1460 = vld [vmem:[%s1440 + $0x98] sm:$0xff]
        %v1461 = vld [vmem:[%s1440 + $0xa0] sm:$0xff]
        %v1462 = vld [vmem:[%s1440 + $0xa8] sm:$0xff]
        %v1463 = vld [vmem:[%s1440 + $0xb0] sm:$0xff]
        %v1464 = vld [vmem:[%s1440 + $0xb8] sm:$0xff]
        %v1465 = vld [vmem:[%s1440 + $0xc0] sm:$0xff]
        %v1466 = vld [vmem:[%s1440 + $0xc8] sm:$0xff]
        %v1467 = vld [vmem:[%s1440 + $0xd0] sm:$0xff]
        %v1468 = vld [vmem:[%s1440 + $0xd8] sm:$0xff]
        %v1469 = vld [vmem:[%s1440 + $0xe0] sm:$0xff]
        %v1470 = vld [vmem:[%s1440 + $0xe8] sm:$0xff]
        %v1471 = vld [vmem:[%s1440 + $0xf0] sm:$0xff]
        %v1472 = vld [vmem:[%s1440 + $0xf8] sm:$0xff]
        %s1473 = scalar_lea.vmem %s6, 4
        %v1474 = vld [vmem:[%s1473] sm:$0x3]
        %v1476 = vlaneseq
        %v1477 = vshrl.u32 %v1476, 7
        %v1478 = vsub.s32 0, %v1477
        %v1479 = vrot.slane %v1474, %v1478
        %v1480 = vlaneseq
        %v1481 = vshrl.u32 %v1480, 7
        %v1482 = vsub.s32 1, %v1481
        %v1483 = vrot.slane %v1474, %v1482
        %1486 = vmatprep.subr.mxu0 %v1472
        %1487 = vmatpush1.msra.mxu0 %v1471
        %1488 = vmatprep.subr.mxu0 %v1470
        %1489 = vmatpush1.msra.mxu0 %v1469
        %1490 = vmatprep.subr.mxu0 %v1468
        %1491 = vmatpush1.msra.mxu0 %v1467
        %1492 = vmatprep.subr.mxu0 %v1466
        %1493 = vmatpush1.msra.mxu0 %v1465
        %1494 = vmatprep.subr.mxu0 %v1464
        %1495 = vmatpush1.msra.mxu0 %v1463
        %1496 = vmatprep.subr.mxu0 %v1462
        %1497 = vmatpush1.msra.mxu0 %v1461
        %1498 = vmatprep.subr.mxu0 %v1460
        %1499 = vmatpush1.msra.mxu0 %v1459
        %1500 = vmatprep.subr.mxu0 %v1458
        %1501 = vmatpush1.msra.mxu0 %v1457
        %1502 = vmatprep.subr.mxu0 %v1456
        %1503 = vmatpush1.msra.mxu0 %v1455
        %1504 = vmatprep.subr.mxu0 %v1454
        %1505 = vmatpush1.msra.mxu0 %v1453
        %1506 = vmatprep.subr.mxu0 %v1452
        %1507 = vmatpush1.msra.mxu0 %v1451
        %1508 = vmatprep.subr.mxu0 %v1450
        %1509 = vmatpush1.msra.mxu0 %v1449
        %1510 = vmatprep.subr.mxu0 %v1448
        %1511 = vmatpush1.msra.mxu0 %v1447
        %1512 = vmatprep.subr.mxu0 %v1446
        %1513 = vmatpush1.msra.mxu0 %v1445
        %1514 = vmatprep.subr.mxu0 %v1444
        %1515 = vmatpush1.msra.mxu0 %v1443
        %1516 = vmatprep.subr.mxu0 %v1442
        %1517 = vmatpush1.msra.mxu0 %v1441
        %1518 = vmatprep.subr.mxu0 0.0
        %1519 = vmatpush2.msra.mxu0 0.0
        %1520 = vmatprep.subr.mxu0 0.0
        %1521 = vmatpush2.msra.mxu0 0.0
        %1522 = vmatprep.subr.mxu0 0.0
        %1523 = vmatpush2.msra.mxu0 0.0
        %1524 = vmatprep.subr.mxu0 0.0
        %1525 = vmatpush2.msra.mxu0 0.0
        %1526 = vmatprep.subr.mxu0 0.0
        %1527 = vmatpush2.msra.mxu0 0.0
        %1528 = vmatprep.subr.mxu0 0.0
        %1529 = vmatpush2.msra.mxu0 0.0
        %1530 = vmatprep.subr.mxu0 0.0
        %1531 = vmatpush2.msra.mxu0 0.0
        %1532 = vmatprep.subr.mxu0 0.0
        %1533 = vmatpush2.msra.mxu0 0.0
        %1534 = vmatprep.subr.mxu0 0.0
        %1535 = vmatpush2.msra.mxu0 0.0
        %1536 = vmatprep.subr.mxu0 0.0
        %1537 = vmatpush2.msra.mxu0 0.0
        %1538 = vmatprep.subr.mxu0 0.0
        %1539 = vmatpush2.msra.mxu0 0.0
        %1540 = vmatprep.subr.mxu0 0.0
        %1541 = vmatpush2.msra.mxu0 0.0
        %1542 = vmatprep.subr.mxu0 0.0
        %1543 = vmatpush2.msra.mxu0 0.0
        %1544 = vmatprep.subr.mxu0 0.0
        %1545 = vmatpush2.msra.mxu0 0.0
        %1546 = vmatprep.subr.mxu0 0.0
        %1547 = vmatpush2.msra.mxu0 0.0
        %1548 = vmatprep.subr.mxu0 0.0
        %1549 = vmatpush2.msra.mxu0 0.0
        %1550 = vmatprep.mubr.f32.mxu0 0.0
        %1551 = vmatmul.mubr.f32.gmra.mxu0 %v1438
        %v1552 = vpop.f32.mrf.mxu0
        %v1553 = vadd.f32 %v1479, %v1552
        %v1554 = vpop.f32.mrf.mxu0
        %v1555 = vadd.f32 %v1483, %v1554
        %1556 = vmatprep.mubr.f32.mxu0 0.0
        %1557 = vmatmul.mubr.f32.gmra.mxu0 %v1439
        %v1558 = vpop.f32.mrf.mxu0
        %v1559 = vadd.f32 %v1479, %v1558
        %v1560 = vpop.f32.mrf.mxu0
        %v1561 = vadd.f32 %v1483, %v1560
        %1562 = vdwg.mxu0
        %v1563 = vadd.f32 %v1186, %v1553
        %v1564 = vadd.f32 %v1187, %v1559
        %v1565 = vadd.f32 %v1188, %v1555
        %v1566 = vadd.f32 %v1189, %v1561
        %1567 = vst [vmem:[#allocation2 + $0x10] sm:$0xff] %v1563
        %1568 = vst [vmem:[#allocation2 + $0x18] sm:$0xff] %v1564
        %v1569 = vld [vmem:[#allocation2 + $0x8] sm:$0xff]
        %v1570 = vld [vmem:[#allocation2 + $0x10] sm:$0xff]
        %v1571 = vld [vmem:[#allocation2 + $0x18] sm:$0xff]
        %v1572 = vld [vmem:[#allocation2 + $0x20] sm:$0xff]
        %s1573 = scalar_lea.vmem [#allocation3], 1152
        %v1574 = vld [vmem:[%s1573] sm:$0xff]
        %v1575 = vld [vmem:[%s1573 + $0x8] sm:$0xff]
        %v1576 = vld [vmem:[%s1573 + $0x10] sm:$0xff]
        %v1577 = vld [vmem:[%s1573 + $0x18] sm:$0xff]
        %v1578 = vld [vmem:[%s1573 + $0x20] sm:$0xff]
        %v1579 = vld [vmem:[%s1573 + $0x28] sm:$0xff]
        %v1580 = vld [vmem:[%s1573 + $0x30] sm:$0xff]
        %v1581 = vld [vmem:[%s1573 + $0x38] sm:$0xff]
        %v1582 = vld [vmem:[%s1573 + $0x40] sm:$0xff]
        %v1583 = vld [vmem:[%s1573 + $0x48] sm:$0xff]
        %v1584 = vld [vmem:[%s1573 + $0x50] sm:$0xff]
        %v1585 = vld [vmem:[%s1573 + $0x58] sm:$0xff]
        %v1586 = vld [vmem:[%s1573 + $0x60] sm:$0xff]
        %v1587 = vld [vmem:[%s1573 + $0x68] sm:$0xff]
        %v1588 = vld [vmem:[%s1573 + $0x70] sm:$0xff]
        %v1589 = vld [vmem:[%s1573 + $0x78] sm:$0xff]
        %v1590 = vld [vmem:[%s1573 + $0x80] sm:$0xff]
        %v1591 = vld [vmem:[%s1573 + $0x88] sm:$0xff]
        %v1592 = vld [vmem:[%s1573 + $0x90] sm:$0xff]
        %v1593 = vld [vmem:[%s1573 + $0x98] sm:$0xff]
        %v1594 = vld [vmem:[%s1573 + $0xa0] sm:$0xff]
        %v1595 = vld [vmem:[%s1573 + $0xa8] sm:$0xff]
        %v1596 = vld [vmem:[%s1573 + $0xb0] sm:$0xff]
        %v1597 = vld [vmem:[%s1573 + $0xb8] sm:$0xff]
        %v1598 = vld [vmem:[%s1573 + $0xc0] sm:$0xff]
        %v1599 = vld [vmem:[%s1573 + $0xc8] sm:$0xff]
        %v1600 = vld [vmem:[%s1573 + $0xd0] sm:$0xff]
        %v1601 = vld [vmem:[%s1573 + $0xd8] sm:$0xff]
        %v1602 = vld [vmem:[%s1573 + $0xe0] sm:$0xff]
        %v1603 = vld [vmem:[%s1573 + $0xe8] sm:$0xff]
        %v1604 = vld [vmem:[%s1573 + $0xf0] sm:$0xff]
        %v1605 = vld [vmem:[%s1573 + $0xf8] sm:$0xff]
        %v1606 = vld [vmem:[%s1573 + $0x100] sm:$0xff]
        %v1607 = vld [vmem:[%s1573 + $0x108] sm:$0xff]
        %v1608 = vld [vmem:[%s1573 + $0x110] sm:$0xff]
        %v1609 = vld [vmem:[%s1573 + $0x118] sm:$0xff]
        %v1610 = vld [vmem:[%s1573 + $0x120] sm:$0xff]
        %v1611 = vld [vmem:[%s1573 + $0x128] sm:$0xff]
        %v1612 = vld [vmem:[%s1573 + $0x130] sm:$0xff]
        %v1613 = vld [vmem:[%s1573 + $0x138] sm:$0xff]
        %v1614 = vld [vmem:[%s1573 + $0x140] sm:$0xff]
        %v1615 = vld [vmem:[%s1573 + $0x148] sm:$0xff]
        %v1616 = vld [vmem:[%s1573 + $0x150] sm:$0xff]
        %v1617 = vld [vmem:[%s1573 + $0x158] sm:$0xff]
        %v1618 = vld [vmem:[%s1573 + $0x160] sm:$0xff]
        %v1619 = vld [vmem:[%s1573 + $0x168] sm:$0xff]
        %v1620 = vld [vmem:[%s1573 + $0x170] sm:$0xff]
        %v1621 = vld [vmem:[%s1573 + $0x178] sm:$0xff]
        %s1622 = scalar_lea.vmem %s4, 3
        %v1623 = vld [vmem:[%s1622] sm:$0x1]
        %v1625 = vlaneseq
        %v1626 = vshrl.u32 %v1625, 7
        %v1627 = vsub.s32 0, %v1626
        %v1628 = vrot.slane %v1623, %v1627
        %1630 = vmatprep.subr.mxu0 0.0
        %1631 = vmatpush1.msra.mxu0 %v1589
        %1632 = vmatprep.subr.mxu0 0.0
        %1633 = vmatpush1.msra.mxu0 %v1588
        %1634 = vmatprep.subr.mxu0 0.0
        %1635 = vmatpush1.msra.mxu0 %v1587
        %1636 = vmatprep.subr.mxu0 0.0
        %1637 = vmatpush1.msra.mxu0 %v1586
        %1638 = vmatprep.subr.mxu0 0.0
        %1639 = vmatpush1.msra.mxu0 %v1585
        %1640 = vmatprep.subr.mxu0 0.0
        %1641 = vmatpush1.msra.mxu0 %v1584
        %1642 = vmatprep.subr.mxu0 0.0
        %1643 = vmatpush1.msra.mxu0 %v1583
        %1644 = vmatprep.subr.mxu0 0.0
        %1645 = vmatpush1.msra.mxu0 %v1582
        %1646 = vmatprep.subr.mxu0 0.0
        %1647 = vmatpush1.msra.mxu0 %v1581
        %1648 = vmatprep.subr.mxu0 0.0
        %1649 = vmatpush1.msra.mxu0 %v1580
        %1650 = vmatprep.subr.mxu0 0.0
        %1651 = vmatpush1.msra.mxu0 %v1579
        %1652 = vmatprep.subr.mxu0 0.0
        %1653 = vmatpush1.msra.mxu0 %v1578
        %1654 = vmatprep.subr.mxu0 0.0
        %1655 = vmatpush1.msra.mxu0 %v1577
        %1656 = vmatprep.subr.mxu0 0.0
        %1657 = vmatpush1.msra.mxu0 %v1576
        %1658 = vmatprep.subr.mxu0 0.0
        %1659 = vmatpush1.msra.mxu0 %v1575
        %1660 = vmatprep.subr.mxu0 0.0
        %1661 = vmatpush1.msra.mxu0 %v1574
        %1662 = vmatprep.subr.mxu0 0.0
        %1663 = vmatpush2.msra.mxu0 %v1605
        %1664 = vmatprep.subr.mxu0 0.0
        %1665 = vmatpush2.msra.mxu0 %v1604
        %1666 = vmatprep.subr.mxu0 0.0
        %1667 = vmatpush2.msra.mxu0 %v1603
        %1668 = vmatprep.subr.mxu0 0.0
        %1669 = vmatpush2.msra.mxu0 %v1602
        %1670 = vmatprep.subr.mxu0 0.0
        %1671 = vmatpush2.msra.mxu0 %v1601
        %1672 = vmatprep.subr.mxu0 0.0
        %1673 = vmatpush2.msra.mxu0 %v1600
        %1674 = vmatprep.subr.mxu0 0.0
        %1675 = vmatpush2.msra.mxu0 %v1599
        %1676 = vmatprep.subr.mxu0 0.0
        %1677 = vmatpush2.msra.mxu0 %v1598
        %1678 = vmatprep.subr.mxu0 0.0
        %1679 = vmatpush2.msra.mxu0 %v1597
        %1680 = vmatprep.subr.mxu0 0.0
        %1681 = vmatpush2.msra.mxu0 %v1596
        %1682 = vmatprep.subr.mxu0 0.0
        %1683 = vmatpush2.msra.mxu0 %v1595
        %1684 = vmatprep.subr.mxu0 0.0
        %1685 = vmatpush2.msra.mxu0 %v1594
        %1686 = vmatprep.subr.mxu0 0.0
        %1687 = vmatpush2.msra.mxu0 %v1593
        %1688 = vmatprep.subr.mxu0 0.0
        %1689 = vmatpush2.msra.mxu0 %v1592
        %1690 = vmatprep.subr.mxu0 0.0
        %1691 = vmatpush2.msra.mxu0 %v1591
        %1692 = vmatprep.subr.mxu0 0.0
        %1693 = vmatpush2.msra.mxu0 %v1590
        %1694 = vmatprep.mubr.f32.mxu0 %v1570
        %1695 = vmatmul.mubr.f32.gmra.mxu0 %v1569
        %v1696 = vpop.f32.mrf.mxu0
        %v1697 = vadd.f32 %v1628, %v1696
        %v1698 = vpop.f32.mrf.mxu0
        %1699 = vmatprep.mubr.f32.mxu0 %v1571
        %1700 = vmatmul.mubr.f32.gmra.mxu0 %v1570
        %v1701 = vpop.f32.mrf.mxu0
        %v1702 = vadd.f32 %v1628, %v1701
        %v1703 = vpop.f32.mrf.mxu0
        %1704 = vdwg.mxu0
        %1705 = vmatprep.subr.mxu0 0.0
        %1706 = vmatpush1.msra.mxu0 %v1621
        %1707 = vmatprep.subr.mxu0 0.0
        %1708 = vmatpush1.msra.mxu0 %v1620
        %1709 = vmatprep.subr.mxu0 0.0
        %1710 = vmatpush1.msra.mxu0 %v1619
        %1711 = vmatprep.subr.mxu0 0.0
        %1712 = vmatpush1.msra.mxu0 %v1618
        %1713 = vmatprep.subr.mxu0 0.0
        %1714 = vmatpush1.msra.mxu0 %v1617
        %1715 = vmatprep.subr.mxu0 0.0
        %1716 = vmatpush1.msra.mxu0 %v1616
        %1717 = vmatprep.subr.mxu0 0.0
        %1718 = vmatpush1.msra.mxu0 %v1615
        %1719 = vmatprep.subr.mxu0 0.0
        %1720 = vmatpush1.msra.mxu0 %v1614
        %1721 = vmatprep.subr.mxu0 0.0
        %1722 = vmatpush1.msra.mxu0 %v1613
        %1723 = vmatprep.subr.mxu0 0.0
        %1724 = vmatpush1.msra.mxu0 %v1612
        %1725 = vmatprep.subr.mxu0 0.0
        %1726 = vmatpush1.msra.mxu0 %v1611
        %1727 = vmatprep.subr.mxu0 0.0
        %1728 = vmatpush1.msra.mxu0 %v1610
        %1729 = vmatprep.subr.mxu0 0.0
        %1730 = vmatpush1.msra.mxu0 %v1609
        %1731 = vmatprep.subr.mxu0 0.0
        %1732 = vmatpush1.msra.mxu0 %v1608
        %1733 = vmatprep.subr.mxu0 0.0
        %1734 = vmatpush1.msra.mxu0 %v1607
        %1735 = vmatprep.subr.mxu0 0.0
        %1736 = vmatpush1.msra.mxu0 %v1606
        %1737 = vmatprep.subr.mxu0 0.0
        %1738 = vmatpush2.msra.mxu0 0.0
        %1739 = vmatprep.subr.mxu0 0.0
        %1740 = vmatpush2.msra.mxu0 0.0
        %1741 = vmatprep.subr.mxu0 0.0
        %1742 = vmatpush2.msra.mxu0 0.0
        %1743 = vmatprep.subr.mxu0 0.0
        %1744 = vmatpush2.msra.mxu0 0.0
        %1745 = vmatprep.subr.mxu0 0.0
        %1746 = vmatpush2.msra.mxu0 0.0
        %1747 = vmatprep.subr.mxu0 0.0
        %1748 = vmatpush2.msra.mxu0 0.0
        %1749 = vmatprep.subr.mxu0 0.0
        %1750 = vmatpush2.msra.mxu0 0.0
        %1751 = vmatprep.subr.mxu0 0.0
        %1752 = vmatpush2.msra.mxu0 0.0
        %1753 = vmatprep.subr.mxu0 0.0
        %1754 = vmatpush2.msra.mxu0 0.0
        %1755 = vmatprep.subr.mxu0 0.0
        %1756 = vmatpush2.msra.mxu0 0.0
        %1757 = vmatprep.subr.mxu0 0.0
        %1758 = vmatpush2.msra.mxu0 0.0
        %1759 = vmatprep.subr.mxu0 0.0
        %1760 = vmatpush2.msra.mxu0 0.0
        %1761 = vmatprep.subr.mxu0 0.0
        %1762 = vmatpush2.msra.mxu0 0.0
        %1763 = vmatprep.subr.mxu0 0.0
        %1764 = vmatpush2.msra.mxu0 0.0
        %1765 = vmatprep.subr.mxu0 0.0
        %1766 = vmatpush2.msra.mxu0 0.0
        %1767 = vmatprep.subr.mxu0 0.0
        %1768 = vmatpush2.msra.mxu0 0.0
        %1769 = vmatprep.mubr.f32.mxu0 0.0
        %1770 = vmatmul.mubr.f32.gmra.mxu0 %v1571
        %v1771 = vpop.f32.mrf.mxu0
        %v1772 = vadd.f32 %v1697, %v1771
        %v1773 = vpop.f32.mrf.mxu0
        %1774 = vmatprep.mubr.f32.mxu0 0.0
        %1775 = vmatmul.mubr.f32.gmra.mxu0 %v1572
        %v1776 = vpop.f32.mrf.mxu0
        %v1777 = vadd.f32 %v1702, %v1776
        %v1778 = vpop.f32.mrf.mxu0
        %1779 = vdwg.mxu0
        %v1780 = vtanh.pop %v1772
        %v1781 = vtanh.pop %v1777
        %v1782 = vxor.u32 %v1772, 2147483648
        %v1783 = vxor.u32 %v1777, 2147483648
        %v1784 = vmul.f32 %v1782, 1.442695
        %v1785 = vpow.pop %v1784
        %v1786 = vmul.f32 %v1783, 1.442695
        %v1787 = vpow.pop %v1786
        %v1788 = vadd.f32 %v1785, 1.0
        %v1789 = vadd.f32 %v1787, 1.0
        %v1790 = vrcp.pop %v1788
        %v1791 = vmul.f32 1.0, %v1790
        %v1792 = vrcp.pop %v1789
        %v1793 = vmul.f32 1.0, %v1792
        %v1794 = vmul.f32 %v1780, %v1791
        %v1795 = vmul.f32 %v1781, %v1793
        %s1796 = scalar_lea.vmem [#allocation6], 768
        %v1797 = vld [vmem:[%s1796] sm:$0xff]
        %v1798 = vld [vmem:[%s1796 + $0x8] sm:$0xff]
        %v1799 = vld [vmem:[%s1796 + $0x10] sm:$0xff]
        %v1800 = vld [vmem:[%s1796 + $0x18] sm:$0xff]
        %v1801 = vld [vmem:[%s1796 + $0x20] sm:$0xff]
        %v1802 = vld [vmem:[%s1796 + $0x28] sm:$0xff]
        %v1803 = vld [vmem:[%s1796 + $0x30] sm:$0xff]
        %v1804 = vld [vmem:[%s1796 + $0x38] sm:$0xff]
        %v1805 = vld [vmem:[%s1796 + $0x40] sm:$0xff]
        %v1806 = vld [vmem:[%s1796 + $0x48] sm:$0xff]
        %v1807 = vld [vmem:[%s1796 + $0x50] sm:$0xff]
        %v1808 = vld [vmem:[%s1796 + $0x58] sm:$0xff]
        %v1809 = vld [vmem:[%s1796 + $0x60] sm:$0xff]
        %v1810 = vld [vmem:[%s1796 + $0x68] sm:$0xff]
        %v1811 = vld [vmem:[%s1796 + $0x70] sm:$0xff]
        %v1812 = vld [vmem:[%s1796 + $0x78] sm:$0xff]
        %v1813 = vld [vmem:[%s1796 + $0x80] sm:$0xff]
        %v1814 = vld [vmem:[%s1796 + $0x88] sm:$0xff]
        %v1815 = vld [vmem:[%s1796 + $0x90] sm:$0xff]
        %v1816 = vld [vmem:[%s1796 + $0x98] sm:$0xff]
        %v1817 = vld [vmem:[%s1796 + $0xa0] sm:$0xff]
        %v1818 = vld [vmem:[%s1796 + $0xa8] sm:$0xff]
        %v1819 = vld [vmem:[%s1796 + $0xb0] sm:$0xff]
        %v1820 = vld [vmem:[%s1796 + $0xb8] sm:$0xff]
        %v1821 = vld [vmem:[%s1796 + $0xc0] sm:$0xff]
        %v1822 = vld [vmem:[%s1796 + $0xc8] sm:$0xff]
        %v1823 = vld [vmem:[%s1796 + $0xd0] sm:$0xff]
        %v1824 = vld [vmem:[%s1796 + $0xd8] sm:$0xff]
        %v1825 = vld [vmem:[%s1796 + $0xe0] sm:$0xff]
        %v1826 = vld [vmem:[%s1796 + $0xe8] sm:$0xff]
        %v1827 = vld [vmem:[%s1796 + $0xf0] sm:$0xff]
        %v1828 = vld [vmem:[%s1796 + $0xf8] sm:$0xff]
        %s1829 = scalar_lea.vmem %s6, 6
        %v1830 = vld [vmem:[%s1829] sm:$0x3]
        %v1832 = vlaneseq
        %v1833 = vshrl.u32 %v1832, 7
        %v1834 = vsub.s32 0, %v1833
        %v1835 = vrot.slane %v1830, %v1834
        %v1836 = vlaneseq
        %v1837 = vshrl.u32 %v1836, 7
        %v1838 = vsub.s32 1, %v1837
        %v1839 = vrot.slane %v1830, %v1838
        %1842 = vmatprep.subr.mxu0 %v1828
        %1843 = vmatpush1.msra.mxu0 %v1827
        %1844 = vmatprep.subr.mxu0 %v1826
        %1845 = vmatpush1.msra.mxu0 %v1825
        %1846 = vmatprep.subr.mxu0 %v1824
        %1847 = vmatpush1.msra.mxu0 %v1823
        %1848 = vmatprep.subr.mxu0 %v1822
        %1849 = vmatpush1.msra.mxu0 %v1821
        %1850 = vmatprep.subr.mxu0 %v1820
        %1851 = vmatpush1.msra.mxu0 %v1819
        %1852 = vmatprep.subr.mxu0 %v1818
        %1853 = vmatpush1.msra.mxu0 %v1817
        %1854 = vmatprep.subr.mxu0 %v1816
        %1855 = vmatpush1.msra.mxu0 %v1815
        %1856 = vmatprep.subr.mxu0 %v1814
        %1857 = vmatpush1.msra.mxu0 %v1813
        %1858 = vmatprep.subr.mxu0 %v1812
        %1859 = vmatpush1.msra.mxu0 %v1811
        %1860 = vmatprep.subr.mxu0 %v1810
        %1861 = vmatpush1.msra.mxu0 %v1809
        %1862 = vmatprep.subr.mxu0 %v1808
        %1863 = vmatpush1.msra.mxu0 %v1807
        %1864 = vmatprep.subr.mxu0 %v1806
        %1865 = vmatpush1.msra.mxu0 %v1805
        %1866 = vmatprep.subr.mxu0 %v1804
        %1867 = vmatpush1.msra.mxu0 %v1803
        %1868 = vmatprep.subr.mxu0 %v1802
        %1869 = vmatpush1.msra.mxu0 %v1801
        %1870 = vmatprep.subr.mxu0 %v1800
        %1871 = vmatpush1.msra.mxu0 %v1799
        %1872 = vmatprep.subr.mxu0 %v1798
        %1873 = vmatpush1.msra.mxu0 %v1797
        %1874 = vmatprep.subr.mxu0 0.0
        %1875 = vmatpush2.msra.mxu0 0.0
        %1876 = vmatprep.subr.mxu0 0.0
        %1877 = vmatpush2.msra.mxu0 0.0
        %1878 = vmatprep.subr.mxu0 0.0
        %1879 = vmatpush2.msra.mxu0 0.0
        %1880 = vmatprep.subr.mxu0 0.0
        %1881 = vmatpush2.msra.mxu0 0.0
        %1882 = vmatprep.subr.mxu0 0.0
        %1883 = vmatpush2.msra.mxu0 0.0
        %1884 = vmatprep.subr.mxu0 0.0
        %1885 = vmatpush2.msra.mxu0 0.0
        %1886 = vmatprep.subr.mxu0 0.0
        %1887 = vmatpush2.msra.mxu0 0.0
        %1888 = vmatprep.subr.mxu0 0.0
        %1889 = vmatpush2.msra.mxu0 0.0
        %1890 = vmatprep.subr.mxu0 0.0
        %1891 = vmatpush2.msra.mxu0 0.0
        %1892 = vmatprep.subr.mxu0 0.0
        %1893 = vmatpush2.msra.mxu0 0.0
        %1894 = vmatprep.subr.mxu0 0.0
        %1895 = vmatpush2.msra.mxu0 0.0
        %1896 = vmatprep.subr.mxu0 0.0
        %1897 = vmatpush2.msra.mxu0 0.0
        %1898 = vmatprep.subr.mxu0 0.0
        %1899 = vmatpush2.msra.mxu0 0.0
        %1900 = vmatprep.subr.mxu0 0.0
        %1901 = vmatpush2.msra.mxu0 0.0
        %1902 = vmatprep.subr.mxu0 0.0
        %1903 = vmatpush2.msra.mxu0 0.0
        %1904 = vmatprep.subr.mxu0 0.0
        %1905 = vmatpush2.msra.mxu0 0.0
        %1906 = vmatprep.mubr.f32.mxu0 0.0
        %1907 = vmatmul.mubr.f32.gmra.mxu0 %v1794
        %v1908 = vpop.f32.mrf.mxu0
        %v1909 = vadd.f32 %v1835, %v1908
        %v1910 = vpop.f32.mrf.mxu0
        %v1911 = vadd.f32 %v1839, %v1910
        %1912 = vmatprep.mubr.f32.mxu0 0.0
        %1913 = vmatmul.mubr.f32.gmra.mxu0 %v1795
        %v1914 = vpop.f32.mrf.mxu0
        %v1915 = vadd.f32 %v1835, %v1914
        %v1916 = vpop.f32.mrf.mxu0
        %v1917 = vadd.f32 %v1839, %v1916
        %1918 = vdwg.mxu0
        %v1919 = vadd.f32 %v1563, %v1909
        %v1920 = vadd.f32 %v1564, %v1915
        %v1921 = vadd.f32 %v1565, %v1911
        %v1922 = vadd.f32 %v1566, %v1917
        %1923 = vst [vmem:[#allocation2 + $0x10] sm:$0xff] %v1919
        %1924 = vst [vmem:[#allocation2 + $0x18] sm:$0xff] %v1920
        %v1925 = vld [vmem:[#allocation2] sm:$0xff]
        %v1926 = vld [vmem:[#allocation2 + $0x8] sm:$0xff]
        %v1927 = vld [vmem:[#allocation2 + $0x10] sm:$0xff]
        %v1928 = vld [vmem:[#allocation2 + $0x18] sm:$0xff]
        %v1929 = vld [vmem:[#allocation2 + $0x20] sm:$0xff]
        %v1930 = vld [vmem:[#allocation2 + $0x28] sm:$0xff]
        %s1931 = scalar_lea.vmem [#allocation3], 1536
        %v1932 = vld [vmem:[%s1931] sm:$0xff]
        %v1933 = vld [vmem:[%s1931 + $0x8] sm:$0xff]
        %v1934 = vld [vmem:[%s1931 + $0x10] sm:$0xff]
        %v1935 = vld [vmem:[%s1931 + $0x18] sm:$0xff]
        %v1936 = vld [vmem:[%s1931 + $0x20] sm:$0xff]
        %v1937 = vld [vmem:[%s1931 + $0x28] sm:$0xff]
        %v1938 = vld [vmem:[%s1931 + $0x30] sm:$0xff]
        %v1939 = vld [vmem:[%s1931 + $0x38] sm:$0xff]
        %v1940 = vld [vmem:[%s1931 + $0x40] sm:$0xff]
        %v1941 = vld [vmem:[%s1931 + $0x48] sm:$0xff]
        %v1942 = vld [vmem:[%s1931 + $0x50] sm:$0xff]
        %v1943 = vld [vmem:[%s1931 + $0x58] sm:$0xff]
        %v1944 = vld [vmem:[%s1931 + $0x60] sm:$0xff]
        %v1945 = vld [vmem:[%s1931 + $0x68] sm:$0xff]
        %v1946 = vld [vmem:[%s1931 + $0x70] sm:$0xff]
        %v1947 = vld [vmem:[%s1931 + $0x78] sm:$0xff]
        %v1948 = vld [vmem:[%s1931 + $0x80] sm:$0xff]
        %v1949 = vld [vmem:[%s1931 + $0x88] sm:$0xff]
        %v1950 = vld [vmem:[%s1931 + $0x90] sm:$0xff]
        %v1951 = vld [vmem:[%s1931 + $0x98] sm:$0xff]
        %v1952 = vld [vmem:[%s1931 + $0xa0] sm:$0xff]
        %v1953 = vld [vmem:[%s1931 + $0xa8] sm:$0xff]
        %v1954 = vld [vmem:[%s1931 + $0xb0] sm:$0xff]
        %v1955 = vld [vmem:[%s1931 + $0xb8] sm:$0xff]
        %v1956 = vld [vmem:[%s1931 + $0xc0] sm:$0xff]
        %v1957 = vld [vmem:[%s1931 + $0xc8] sm:$0xff]
        %v1958 = vld [vmem:[%s1931 + $0xd0] sm:$0xff]
        %v1959 = vld [vmem:[%s1931 + $0xd8] sm:$0xff]
        %v1960 = vld [vmem:[%s1931 + $0xe0] sm:$0xff]
        %v1961 = vld [vmem:[%s1931 + $0xe8] sm:$0xff]
        %v1962 = vld [vmem:[%s1931 + $0xf0] sm:$0xff]
        %v1963 = vld [vmem:[%s1931 + $0xf8] sm:$0xff]
        %v1964 = vld [vmem:[%s1931 + $0x100] sm:$0xff]
        %v1965 = vld [vmem:[%s1931 + $0x108] sm:$0xff]
        %v1966 = vld [vmem:[%s1931 + $0x110] sm:$0xff]
        %v1967 = vld [vmem:[%s1931 + $0x118] sm:$0xff]
        %v1968 = vld [vmem:[%s1931 + $0x120] sm:$0xff]
        %v1969 = vld [vmem:[%s1931 + $0x128] sm:$0xff]
        %v1970 = vld [vmem:[%s1931 + $0x130] sm:$0xff]
        %v1971 = vld [vmem:[%s1931 + $0x138] sm:$0xff]
        %v1972 = vld [vmem:[%s1931 + $0x140] sm:$0xff]
        %v1973 = vld [vmem:[%s1931 + $0x148] sm:$0xff]
        %v1974 = vld [vmem:[%s1931 + $0x150] sm:$0xff]
        %v1975 = vld [vmem:[%s1931 + $0x158] sm:$0xff]
        %v1976 = vld [vmem:[%s1931 + $0x160] sm:$0xff]
        %v1977 = vld [vmem:[%s1931 + $0x168] sm:$0xff]
        %v1978 = vld [vmem:[%s1931 + $0x170] sm:$0xff]
        %v1979 = vld [vmem:[%s1931 + $0x178] sm:$0xff]
        %s1980 = scalar_lea.vmem %s4, 4
        %v1981 = vld [vmem:[%s1980] sm:$0x1]
        %v1983 = vlaneseq
        %v1984 = vshrl.u32 %v1983, 7
        %v1985 = vsub.s32 0, %v1984
        %v1986 = vrot.slane %v1981, %v1985
        %1988 = vmatprep.subr.mxu0 0.0
        %1989 = vmatpush1.msra.mxu0 %v1947
        %1990 = vmatprep.subr.mxu0 0.0
        %1991 = vmatpush1.msra.mxu0 %v1946
        %1992 = vmatprep.subr.mxu0 0.0
        %1993 = vmatpush1.msra.mxu0 %v1945
        %1994 = vmatprep.subr.mxu0 0.0
        %1995 = vmatpush1.msra.mxu0 %v1944
        %1996 = vmatprep.subr.mxu0 0.0
        %1997 = vmatpush1.msra.mxu0 %v1943
        %1998 = vmatprep.subr.mxu0 0.0
        %1999 = vmatpush1.msra.mxu0 %v1942
        %2000 = vmatprep.subr.mxu0 0.0
        %2001 = vmatpush1.msra.mxu0 %v1941
        %2002 = vmatprep.subr.mxu0 0.0
        %2003 = vmatpush1.msra.mxu0 %v1940
        %2004 = vmatprep.subr.mxu0 0.0
        %2005 = vmatpush1.msra.mxu0 %v1939
        %2006 = vmatprep.subr.mxu0 0.0
        %2007 = vmatpush1.msra.mxu0 %v1938
        %2008 = vmatprep.subr.mxu0 0.0
        %2009 = vmatpush1.msra.mxu0 %v1937
        %2010 = vmatprep.subr.mxu0 0.0
        %2011 = vmatpush1.msra.mxu0 %v1936
        %2012 = vmatprep.subr.mxu0 0.0
        %2013 = vmatpush1.msra.mxu0 %v1935
        %2014 = vmatprep.subr.mxu0 0.0
        %2015 = vmatpush1.msra.mxu0 %v1934
        %2016 = vmatprep.subr.mxu0 0.0
        %2017 = vmatpush1.msra.mxu0 %v1933
        %2018 = vmatprep.subr.mxu0 0.0
        %2019 = vmatpush1.msra.mxu0 %v1932
        %2020 = vmatprep.subr.mxu0 0.0
        %2021 = vmatpush2.msra.mxu0 %v1963
        %2022 = vmatprep.subr.mxu0 0.0
        %2023 = vmatpush2.msra.mxu0 %v1962
        %2024 = vmatprep.subr.mxu0 0.0
        %2025 = vmatpush2.msra.mxu0 %v1961
        %2026 = vmatprep.subr.mxu0 0.0
        %2027 = vmatpush2.msra.mxu0 %v1960
        %2028 = vmatprep.subr.mxu0 0.0
        %2029 = vmatpush2.msra.mxu0 %v1959
        %2030 = vmatprep.subr.mxu0 0.0
        %2031 = vmatpush2.msra.mxu0 %v1958
        %2032 = vmatprep.subr.mxu0 0.0
        %2033 = vmatpush2.msra.mxu0 %v1957
        %2034 = vmatprep.subr.mxu0 0.0
        %2035 = vmatpush2.msra.mxu0 %v1956
        %2036 = vmatprep.subr.mxu0 0.0
        %2037 = vmatpush2.msra.mxu0 %v1955
        %2038 = vmatprep.subr.mxu0 0.0
        %2039 = vmatpush2.msra.mxu0 %v1954
        %2040 = vmatprep.subr.mxu0 0.0
        %2041 = vmatpush2.msra.mxu0 %v1953
        %2042 = vmatprep.subr.mxu0 0.0
        %2043 = vmatpush2.msra.mxu0 %v1952
        %2044 = vmatprep.subr.mxu0 0.0
        %2045 = vmatpush2.msra.mxu0 %v1951
        %2046 = vmatprep.subr.mxu0 0.0
        %2047 = vmatpush2.msra.mxu0 %v1950
        %2048 = vmatprep.subr.mxu0 0.0
        %2049 = vmatpush2.msra.mxu0 %v1949
        %2050 = vmatprep.subr.mxu0 0.0
        %2051 = vmatpush2.msra.mxu0 %v1948
        %2052 = vmatprep.mubr.f32.mxu0 %v1927
        %2053 = vmatmul.mubr.f32.gmra.mxu0 %v1925
        %v2054 = vpop.f32.mrf.mxu0
        %v2055 = vadd.f32 %v1986, %v2054
        %v2056 = vpop.f32.mrf.mxu0
        %2057 = vmatprep.mubr.f32.mxu0 %v1928
        %2058 = vmatmul.mubr.f32.gmra.mxu0 %v1926
        %v2059 = vpop.f32.mrf.mxu0
        %v2060 = vadd.f32 %v1986, %v2059
        %v2061 = vpop.f32.mrf.mxu0
        %2062 = vdwg.mxu0
        %2063 = vmatprep.subr.mxu0 0.0
        %2064 = vmatpush1.msra.mxu0 %v1979
        %2065 = vmatprep.subr.mxu0 0.0
        %2066 = vmatpush1.msra.mxu0 %v1978
        %2067 = vmatprep.subr.mxu0 0.0
        %2068 = vmatpush1.msra.mxu0 %v1977
        %2069 = vmatprep.subr.mxu0 0.0
        %2070 = vmatpush1.msra.mxu0 %v1976
        %2071 = vmatprep.subr.mxu0 0.0
        %2072 = vmatpush1.msra.mxu0 %v1975
        %2073 = vmatprep.subr.mxu0 0.0
        %2074 = vmatpush1.msra.mxu0 %v1974
        %2075 = vmatprep.subr.mxu0 0.0
        %2076 = vmatpush1.msra.mxu0 %v1973
        %2077 = vmatprep.subr.mxu0 0.0
        %2078 = vmatpush1.msra.mxu0 %v1972
        %2079 = vmatprep.subr.mxu0 0.0
        %2080 = vmatpush1.msra.mxu0 %v1971
        %2081 = vmatprep.subr.mxu0 0.0
        %2082 = vmatpush1.msra.mxu0 %v1970
        %2083 = vmatprep.subr.mxu0 0.0
        %2084 = vmatpush1.msra.mxu0 %v1969
        %2085 = vmatprep.subr.mxu0 0.0
        %2086 = vmatpush1.msra.mxu0 %v1968
        %2087 = vmatprep.subr.mxu0 0.0
        %2088 = vmatpush1.msra.mxu0 %v1967
        %2089 = vmatprep.subr.mxu0 0.0
        %2090 = vmatpush1.msra.mxu0 %v1966
        %2091 = vmatprep.subr.mxu0 0.0
        %2092 = vmatpush1.msra.mxu0 %v1965
        %2093 = vmatprep.subr.mxu0 0.0
        %2094 = vmatpush1.msra.mxu0 %v1964
        %2095 = vmatprep.subr.mxu0 0.0
        %2096 = vmatpush2.msra.mxu0 0.0
        %2097 = vmatprep.subr.mxu0 0.0
        %2098 = vmatpush2.msra.mxu0 0.0
        %2099 = vmatprep.subr.mxu0 0.0
        %2100 = vmatpush2.msra.mxu0 0.0
        %2101 = vmatprep.subr.mxu0 0.0
        %2102 = vmatpush2.msra.mxu0 0.0
        %2103 = vmatprep.subr.mxu0 0.0
        %2104 = vmatpush2.msra.mxu0 0.0
        %2105 = vmatprep.subr.mxu0 0.0
        %2106 = vmatpush2.msra.mxu0 0.0
        %2107 = vmatprep.subr.mxu0 0.0
        %2108 = vmatpush2.msra.mxu0 0.0
        %2109 = vmatprep.subr.mxu0 0.0
        %2110 = vmatpush2.msra.mxu0 0.0
        %2111 = vmatprep.subr.mxu0 0.0
        %2112 = vmatpush2.msra.mxu0 0.0
        %2113 = vmatprep.subr.mxu0 0.0
        %2114 = vmatpush2.msra.mxu0 0.0
        %2115 = vmatprep.subr.mxu0 0.0
        %2116 = vmatpush2.msra.mxu0 0.0
        %2117 = vmatprep.subr.mxu0 0.0
        %2118 = vmatpush2.msra.mxu0 0.0
        %2119 = vmatprep.subr.mxu0 0.0
        %2120 = vmatpush2.msra.mxu0 0.0
        %2121 = vmatprep.subr.mxu0 0.0
        %2122 = vmatpush2.msra.mxu0 0.0
        %2123 = vmatprep.subr.mxu0 0.0
        %2124 = vmatpush2.msra.mxu0 0.0
        %2125 = vmatprep.subr.mxu0 0.0
        %2126 = vmatpush2.msra.mxu0 0.0
        %2127 = vmatprep.mubr.f32.mxu0 0.0
        %2128 = vmatmul.mubr.f32.gmra.mxu0 %v1929
        %v2129 = vpop.f32.mrf.mxu0
        %v2130 = vadd.f32 %v2055, %v2129
        %v2131 = vpop.f32.mrf.mxu0
        %2132 = vmatprep.mubr.f32.mxu0 0.0
        %2133 = vmatmul.mubr.f32.gmra.mxu0 %v1930
        %v2134 = vpop.f32.mrf.mxu0
        %v2135 = vadd.f32 %v2060, %v2134
        %v2136 = vpop.f32.mrf.mxu0
        %2137 = vdwg.mxu0
        %v2138 = vtanh.pop %v2130
        %v2139 = vtanh.pop %v2135
        %v2140 = vxor.u32 %v2130, 2147483648
        %v2141 = vxor.u32 %v2135, 2147483648
        %v2142 = vmul.f32 %v2140, 1.442695
        %v2143 = vpow.pop %v2142
        %v2144 = vmul.f32 %v2141, 1.442695
        %v2145 = vpow.pop %v2144
        %v2146 = vadd.f32 %v2143, 1.0
        %v2147 = vadd.f32 %v2145, 1.0
        %v2148 = vrcp.pop %v2146
        %v2149 = vmul.f32 1.0, %v2148
        %v2150 = vrcp.pop %v2147
        %v2151 = vmul.f32 1.0, %v2150
        %v2152 = vmul.f32 %v2138, %v2149
        %v2153 = vmul.f32 %v2139, %v2151
        %s2154 = scalar_lea.vmem [#allocation6], 1024
        %v2155 = vld [vmem:[%s2154] sm:$0xff]
        %v2156 = vld [vmem:[%s2154 + $0x8] sm:$0xff]
        %v2157 = vld [vmem:[%s2154 + $0x10] sm:$0xff]
        %v2158 = vld [vmem:[%s2154 + $0x18] sm:$0xff]
        %v2159 = vld [vmem:[%s2154 + $0x20] sm:$0xff]
        %v2160 = vld [vmem:[%s2154 + $0x28] sm:$0xff]
        %v2161 = vld [vmem:[%s2154 + $0x30] sm:$0xff]
        %v2162 = vld [vmem:[%s2154 + $0x38] sm:$0xff]
        %v2163 = vld [vmem:[%s2154 + $0x40] sm:$0xff]
        %v2164 = vld [vmem:[%s2154 + $0x48] sm:$0xff]
        %v2165 = vld [vmem:[%s2154 + $0x50] sm:$0xff]
        %v2166 = vld [vmem:[%s2154 + $0x58] sm:$0xff]
        %v2167 = vld [vmem:[%s2154 + $0x60] sm:$0xff]
        %v2168 = vld [vmem:[%s2154 + $0x68] sm:$0xff]
        %v2169 = vld [vmem:[%s2154 + $0x70] sm:$0xff]
        %v2170 = vld [vmem:[%s2154 + $0x78] sm:$0xff]
        %v2171 = vld [vmem:[%s2154 + $0x80] sm:$0xff]
        %v2172 = vld [vmem:[%s2154 + $0x88] sm:$0xff]
        %v2173 = vld [vmem:[%s2154 + $0x90] sm:$0xff]
        %v2174 = vld [vmem:[%s2154 + $0x98] sm:$0xff]
        %v2175 = vld [vmem:[%s2154 + $0xa0] sm:$0xff]
        %v2176 = vld [vmem:[%s2154 + $0xa8] sm:$0xff]
        %v2177 = vld [vmem:[%s2154 + $0xb0] sm:$0xff]
        %v2178 = vld [vmem:[%s2154 + $0xb8] sm:$0xff]
        %v2179 = vld [vmem:[%s2154 + $0xc0] sm:$0xff]
        %v2180 = vld [vmem:[%s2154 + $0xc8] sm:$0xff]
        %v2181 = vld [vmem:[%s2154 + $0xd0] sm:$0xff]
        %v2182 = vld [vmem:[%s2154 + $0xd8] sm:$0xff]
        %v2183 = vld [vmem:[%s2154 + $0xe0] sm:$0xff]
        %v2184 = vld [vmem:[%s2154 + $0xe8] sm:$0xff]
        %v2185 = vld [vmem:[%s2154 + $0xf0] sm:$0xff]
        %v2186 = vld [vmem:[%s2154 + $0xf8] sm:$0xff]
        %s2187 = scalar_lea.vmem %s6, 8
        %v2188 = vld [vmem:[%s2187] sm:$0x3]
        %v2190 = vlaneseq
        %v2191 = vshrl.u32 %v2190, 7
        %v2192 = vsub.s32 1, %v2191
        %v2193 = vrot.slane %v2188, %v2192
        %2195 = vmatprep.subr.mxu0 %v2186
        %2196 = vmatpush1.msra.mxu0 %v2185
        %2197 = vmatprep.subr.mxu0 %v2184
        %2198 = vmatpush1.msra.mxu0 %v2183
        %2199 = vmatprep.subr.mxu0 %v2182
        %2200 = vmatpush1.msra.mxu0 %v2181
        %2201 = vmatprep.subr.mxu0 %v2180
        %2202 = vmatpush1.msra.mxu0 %v2179
        %2203 = vmatprep.subr.mxu0 %v2178
        %2204 = vmatpush1.msra.mxu0 %v2177
        %2205 = vmatprep.subr.mxu0 %v2176
        %2206 = vmatpush1.msra.mxu0 %v2175
        %2207 = vmatprep.subr.mxu0 %v2174
        %2208 = vmatpush1.msra.mxu0 %v2173
        %2209 = vmatprep.subr.mxu0 %v2172
        %2210 = vmatpush1.msra.mxu0 %v2171
        %2211 = vmatprep.subr.mxu0 %v2170
        %2212 = vmatpush1.msra.mxu0 %v2169
        %2213 = vmatprep.subr.mxu0 %v2168
        %2214 = vmatpush1.msra.mxu0 %v2167
        %2215 = vmatprep.subr.mxu0 %v2166
        %2216 = vmatpush1.msra.mxu0 %v2165
        %2217 = vmatprep.subr.mxu0 %v2164
        %2218 = vmatpush1.msra.mxu0 %v2163
        %2219 = vmatprep.subr.mxu0 %v2162
        %2220 = vmatpush1.msra.mxu0 %v2161
        %2221 = vmatprep.subr.mxu0 %v2160
        %2222 = vmatpush1.msra.mxu0 %v2159
        %2223 = vmatprep.subr.mxu0 %v2158
        %2224 = vmatpush1.msra.mxu0 %v2157
        %2225 = vmatprep.subr.mxu0 %v2156
        %2226 = vmatpush1.msra.mxu0 %v2155
        %2227 = vmatprep.subr.mxu0 0.0
        %2228 = vmatpush2.msra.mxu0 0.0
        %2229 = vmatprep.subr.mxu0 0.0
        %2230 = vmatpush2.msra.mxu0 0.0
        %2231 = vmatprep.subr.mxu0 0.0
        %2232 = vmatpush2.msra.mxu0 0.0
        %2233 = vmatprep.subr.mxu0 0.0
        %2234 = vmatpush2.msra.mxu0 0.0
        %2235 = vmatprep.subr.mxu0 0.0
        %2236 = vmatpush2.msra.mxu0 0.0
        %2237 = vmatprep.subr.mxu0 0.0
        %2238 = vmatpush2.msra.mxu0 0.0
        %2239 = vmatprep.subr.mxu0 0.0
        %2240 = vmatpush2.msra.mxu0 0.0
        %2241 = vmatprep.subr.mxu0 0.0
        %2242 = vmatpush2.msra.mxu0 0.0
        %2243 = vmatprep.subr.mxu0 0.0
        %2244 = vmatpush2.msra.mxu0 0.0
        %2245 = vmatprep.subr.mxu0 0.0
        %2246 = vmatpush2.msra.mxu0 0.0
        %2247 = vmatprep.subr.mxu0 0.0
        %2248 = vmatpush2.msra.mxu0 0.0
        %2249 = vmatprep.subr.mxu0 0.0
        %2250 = vmatpush2.msra.mxu0 0.0
        %2251 = vmatprep.subr.mxu0 0.0
        %2252 = vmatpush2.msra.mxu0 0.0
        %2253 = vmatprep.subr.mxu0 0.0
        %2254 = vmatpush2.msra.mxu0 0.0
        %2255 = vmatprep.subr.mxu0 0.0
        %2256 = vmatpush2.msra.mxu0 0.0
        %2257 = vmatprep.subr.mxu0 0.0
        %2258 = vmatpush2.msra.mxu0 0.0
        %2259 = vmatprep.mubr.f32.mxu0 0.0
        %2260 = vmatmul.mubr.f32.gmra.mxu0 %v2152
        %v2261 = vpop.f32.mrf.mxu0
        %v2262 = vpop.f32.mrf.mxu0
        %v2263 = vadd.f32 %v2193, %v2262
        %2264 = vmatprep.mubr.f32.mxu0 0.0
        %2265 = vmatmul.mubr.f32.gmra.mxu0 %v2153
        %v2266 = vpop.f32.mrf.mxu0
        %v2267 = vpop.f32.mrf.mxu0
        %v2268 = vadd.f32 %v2193, %v2267
        %2269 = vdwg.mxu0
        %v2270 = vadd.f32 %v1921, %v2263
        %v2271 = vadd.f32 %v1922, %v2268
        %v2272 = vmax.f32 %v2270, 0.0
        %v2273 = vmax.f32 %v2271, 0.0
        %v2274 = vld [vmem:[#allocation8] sm:$0xff]
        %v2275 = vld [vmem:[#allocation8 + $0x8] sm:$0xff]
        %v2276 = vld [vmem:[#allocation8 + $0x10] sm:$0xff]
        %v2277 = vld [vmem:[#allocation8 + $0x18] sm:$0xff]
        %v2278 = vld [vmem:[#allocation8 + $0x20] sm:$0xff]
        %v2279 = vld [vmem:[#allocation8 + $0x28] sm:$0xff]
        %v2280 = vld [vmem:[#allocation8 + $0x30] sm:$0xff]
        %v2281 = vld [vmem:[#allocation8 + $0x38] sm:$0xff]
        %v2282 = vld [vmem:[#allocation8 + $0x40] sm:$0xff]
        %v2283 = vld [vmem:[#allocation8 + $0x48] sm:$0xff]
        %v2284 = vld [vmem:[#allocation8 + $0x50] sm:$0xff]
        %v2285 = vld [vmem:[#allocation8 + $0x58] sm:$0xff]
        %v2286 = vld [vmem:[#allocation8 + $0x60] sm:$0xff]
        %v2287 = vld [vmem:[#allocation8 + $0x68] sm:$0xff]
        %v2288 = vld [vmem:[#allocation8 + $0x70] sm:$0xff]
        %v2289 = vld [vmem:[#allocation8 + $0x78] sm:$0xff]
        %v2290 = vld [vmem:[#allocation8 + $0x80] sm:$0xff]
        %v2291 = vld [vmem:[#allocation8 + $0x88] sm:$0xff]
        %v2292 = vld [vmem:[#allocation8 + $0x90] sm:$0xff]
        %v2293 = vld [vmem:[#allocation8 + $0x98] sm:$0xff]
        %v2294 = vld [vmem:[#allocation8 + $0xa0] sm:$0xff]
        %v2295 = vld [vmem:[#allocation8 + $0xa8] sm:$0xff]
        %v2296 = vld [vmem:[#allocation8 + $0xb0] sm:$0xff]
        %v2297 = vld [vmem:[#allocation8 + $0xb8] sm:$0xff]
        %v2298 = vld [vmem:[#allocation8 + $0xc0] sm:$0xff]
        %v2299 = vld [vmem:[#allocation8 + $0xc8] sm:$0xff]
        %v2300 = vld [vmem:[#allocation8 + $0xd0] sm:$0xff]
        %v2301 = vld [vmem:[#allocation8 + $0xd8] sm:$0xff]
        %v2302 = vld [vmem:[#allocation8 + $0xe0] sm:$0xff]
        %v2303 = vld [vmem:[#allocation8 + $0xe8] sm:$0xff]
        %v2304 = vld [vmem:[#allocation8 + $0xf0] sm:$0xff]
        %v2305 = vld [vmem:[#allocation8 + $0xf8] sm:$0xff]
        %v2306 = vld [vmem:[%s8] sm:$0x3]
        %v2308 = vlaneseq
        %v2309 = vshrl.u32 %v2308, 7
        %v2310 = vsub.s32 0, %v2309
        %v2311 = vrot.slane %v2306, %v2310
        %v2312 = vlaneseq
        %v2313 = vshrl.u32 %v2312, 7
        %v2314 = vsub.s32 1, %v2313
        %v2315 = vrot.slane %v2306, %v2314
        %2318 = vmatprep.subr.mxu0 %v2305
        %2319 = vmatpush1.msra.mxu0 %v2304
        %2320 = vmatprep.subr.mxu0 %v2303
        %2321 = vmatpush1.msra.mxu0 %v2302
        %2322 = vmatprep.subr.mxu0 %v2301
        %2323 = vmatpush1.msra.mxu0 %v2300
        %2324 = vmatprep.subr.mxu0 %v2299
        %2325 = vmatpush1.msra.mxu0 %v2298
        %2326 = vmatprep.subr.mxu0 %v2297
        %2327 = vmatpush1.msra.mxu0 %v2296
        %2328 = vmatprep.subr.mxu0 %v2295
        %2329 = vmatpush1.msra.mxu0 %v2294
        %2330 = vmatprep.subr.mxu0 %v2293
        %2331 = vmatpush1.msra.mxu0 %v2292
        %2332 = vmatprep.subr.mxu0 %v2291
        %2333 = vmatpush1.msra.mxu0 %v2290
        %2334 = vmatprep.subr.mxu0 %v2289
        %2335 = vmatpush1.msra.mxu0 %v2288
        %2336 = vmatprep.subr.mxu0 %v2287
        %2337 = vmatpush1.msra.mxu0 %v2286
        %2338 = vmatprep.subr.mxu0 %v2285
        %2339 = vmatpush1.msra.mxu0 %v2284
        %2340 = vmatprep.subr.mxu0 %v2283
        %2341 = vmatpush1.msra.mxu0 %v2282
        %2342 = vmatprep.subr.mxu0 %v2281
        %2343 = vmatpush1.msra.mxu0 %v2280
        %2344 = vmatprep.subr.mxu0 %v2279
        %2345 = vmatpush1.msra.mxu0 %v2278
        %2346 = vmatprep.subr.mxu0 %v2277
        %2347 = vmatpush1.msra.mxu0 %v2276
        %2348 = vmatprep.subr.mxu0 %v2275
        %2349 = vmatpush1.msra.mxu0 %v2274
        %2350 = vmatprep.subr.mxu0 0.0
        %2351 = vmatpush2.msra.mxu0 0.0
        %2352 = vmatprep.subr.mxu0 0.0
        %2353 = vmatpush2.msra.mxu0 0.0
        %2354 = vmatprep.subr.mxu0 0.0
        %2355 = vmatpush2.msra.mxu0 0.0
        %2356 = vmatprep.subr.mxu0 0.0
        %2357 = vmatpush2.msra.mxu0 0.0
        %2358 = vmatprep.subr.mxu0 0.0
        %2359 = vmatpush2.msra.mxu0 0.0
        %2360 = vmatprep.subr.mxu0 0.0
        %2361 = vmatpush2.msra.mxu0 0.0
        %2362 = vmatprep.subr.mxu0 0.0
        %2363 = vmatpush2.msra.mxu0 0.0
        %2364 = vmatprep.subr.mxu0 0.0
        %2365 = vmatpush2.msra.mxu0 0.0
        %2366 = vmatprep.subr.mxu0 0.0
        %2367 = vmatpush2.msra.mxu0 0.0
        %2368 = vmatprep.subr.mxu0 0.0
        %2369 = vmatpush2.msra.mxu0 0.0
        %2370 = vmatprep.subr.mxu0 0.0
        %2371 = vmatpush2.msra.mxu0 0.0
        %2372 = vmatprep.subr.mxu0 0.0
        %2373 = vmatpush2.msra.mxu0 0.0
        %2374 = vmatprep.subr.mxu0 0.0
        %2375 = vmatpush2.msra.mxu0 0.0
        %2376 = vmatprep.subr.mxu0 0.0
        %2377 = vmatpush2.msra.mxu0 0.0
        %2378 = vmatprep.subr.mxu0 0.0
        %2379 = vmatpush2.msra.mxu0 0.0
        %2380 = vmatprep.subr.mxu0 0.0
        %2381 = vmatpush2.msra.mxu0 0.0
        %2382 = vmatprep.mubr.f32.mxu0 0.0
        %2383 = vmatmul.mubr.f32.gmra.mxu0 %v2272
        %v2384 = vpop.f32.mrf.mxu0
        %v2385 = vadd.f32 %v2311, %v2384
        %v2386 = vpop.f32.mrf.mxu0
        %v2387 = vadd.f32 %v2315, %v2386
        %2388 = vmatprep.mubr.f32.mxu0 0.0
        %2389 = vmatmul.mubr.f32.gmra.mxu0 %v2273
        %v2390 = vpop.f32.mrf.mxu0
        %v2391 = vadd.f32 %v2311, %v2390
        %v2392 = vpop.f32.mrf.mxu0
        %v2393 = vadd.f32 %v2315, %v2392
        %2394 = vdwg.mxu0
        %v2395 = vmax.f32 %v2385, 0.0
        %v2396 = vmax.f32 %v2387, 0.0
        %v2397 = vmax.f32 %v2391, 0.0
        %v2398 = vmax.f32 %v2393, 0.0
        %2399 = vst [vmem:[%s369] sm:$0xff] %v2395
        %2400 = vst [vmem:[%s369 + $0x8] sm:$0xff] %v2396
        %2401 = vst [vmem:[%s369 + $0x10] sm:$0xff] %v2397
        %2402 = vst [vmem:[%s369 + $0x18] sm:$0xff] %v2398
        %s2403 = sand.u32 %s227, 1
        %s2404 = scalar_lea.sflag [#allocation5], %s2403
        %s2405 = sand.u32 %s227, 1
        %s2406 = smul.addr %s2405, 32
        %s2407 = scalar_lea.vmem [#allocation9], %s2406
        // Predicated region
        $region69: #{tpu_custom_call.1} parent=55 // pred_check
          %p2408 = pneg %p237
        $region70: #{tpu_custom_call.1} parent=55 // pred_check_branch
          %2410 = sbr.rel (%p2408) target = $region72
        $region71: #{tpu_custom_call.1} parent=55 // pred_region
          %s2412 = ssub.s32 512, 512
          %2413 = vsyncadd %s2404, %s2412
          %s2414 = smul.addr %s25, 4
          %s2415 = smul.addr %s2414, 128
          %s2416 = scalar_lea.hbm %s9, %s2415
          %s2417 = sshll.u32 %s2407, 4
          %s2418 = int_to_ptr.vmem [resolvable:$true] %s2417
          %2423 = dma.vmem_to_hbm [thread:$0]  %s2418, 512, %s2416, %s2404, 256, 256, 16
        $region72: #{tpu_custom_call.1} parent=55 // pred_fallthru
          _
      $region56: #{tpu_custom_call.1} parent=5 // pred_fallthru
        _
      %p2424 = scmp.le.s32.totalorder 2, %s20
      // Predicated region
      $region73: #{tpu_custom_call.1} parent=5 // pred_check
        %p2425 = pneg %p2424
      $region74: #{tpu_custom_call.1} parent=5 // pred_check_branch
        %2427 = sbr.rel (%p2425) target = $region76
      $region75: #{tpu_custom_call.1} parent=5 // pred_region
        %s2428 = ssub.s32 %s20, 2
        // Predicated region
        $region77: #{tpu_custom_call.1} parent=75 // pred_check
          %p2429 = pneg %p243
        $region78: #{tpu_custom_call.1} parent=75 // pred_check_branch
          %2431 = sbr.rel (%p2429) target = $region80
        $region79: #{tpu_custom_call.1} parent=75 // pred_region
          %s2432 = sand.u32 %s228, 1
          %s2433 = scalar_lea.sflag [#allocation5], %s2432
          %s2434 = sand.u32 %s228, 1
          %s2435 = smul.addr %s2434, 32
          %s2436 = scalar_lea.vmem [#allocation9], %s2435
          %2437 = dma.done %s2433, 512
        $region80: #{tpu_custom_call.1} parent=75 // pred_fallthru
          _
      $region76: #{tpu_custom_call.1} parent=5 // pred_fallthru
        _
    $region6: #{tpu_custom_call.1} parent=1 // loop_footer
      %s24 = sadd.s32 1, %s20
    $region7: #{tpu_custom_call.1} parent=1 // loop_footer_branch
      %19 = sbr.rel target = $region3
    $region8: #{tpu_custom_call.1} parent=1 // loop_exit
      _
    %2438 = vsyncpa [#allocation4], 1
    %s2439 = scalar_lea.sflag [#allocation4], 1
    %2440 = vsyncpa %s2439, 1
    %2441 = vsyncpa [#allocation7], 1
    %2442 = vsyncpa [#allocation5], 1
    %s2443 = scalar_lea.sflag [#allocation5], 1
    %2444 = vsyncpa %s2443, 1

</llo_original>
